<compile_context>
chip_gen: v5e
topology: v5e:2x2
jax: 0.10.0
libtpu: 0.0.40
codegen_flags: <defaults>
</compile_context>

<pallas_src>
import functools

import jax
import jax.numpy as jnp
from jax.experimental import pallas as pl
from jax.experimental.pallas import tpu as pltpu

N_MFCC = 20
N_HID = 12
N_TIMB = 4
N_VOWELS = 12

_SUBLANES = 8          # f32 sublane granularity
_SLAB_COLS = N_MFCC    # widest per-layer "out" dimension (20)


def _round_up(n, m):
    return ((n + m - 1) // m) * m


def _slab_layout():
    """Row layout of the packed parameter slab (weights stored as (in, out))."""
    entries = [
        ("w1", N_MFCC, N_MFCC), ("b1", 1, N_MFCC),
        ("w2", N_MFCC, N_HID),  ("b2", 1, N_HID),
        ("w3", N_HID, N_TIMB),  ("b3", 1, N_TIMB),
        ("w4", N_TIMB, N_VOWELS), ("b4", 1, N_VOWELS),
    ]
    layout, row = {}, 0
    for name, nrows, ncols in entries:
        layout[name] = (row, nrows, ncols)
        row += _round_up(nrows, _SUBLANES)      # 8-row aligned sections
    return layout, _round_up(row, _SUBLANES)


_SLAB_LAYOUT, _SLAB_ROWS = _slab_layout()


def pack_params(params):
    """Pack the 8 PyTorch-layout weights/biases into one (rows, 20) f32 slab."""
    slab = jnp.zeros((_SLAB_ROWS, _SLAB_COLS), jnp.float32)
    for idx in range(1, 5):
        w = jnp.asarray(params[f"w{idx}"], jnp.float32)                  # (out, in)
        b = jnp.asarray(params[f"b{idx}"], jnp.float32).reshape(1, -1)   # (1, out)
        r0, nr, nc = _SLAB_LAYOUT[f"w{idx}"]
        slab = slab.at[r0:r0 + nr, :nc].set(w.T)                         # (in, out)
        r0, nr, nc = _SLAB_LAYOUT[f"b{idx}"]
        slab = slab.at[r0:r0 + nr, :nc].set(b)
    return slab


def _timbre_kernel(x_ref, p_ref, o_ref):
    """4-layer MLP + softmax for one (TB, 20) batch tile in natural layout.

    x_ref: (TB, N_MFCC); p_ref: packed parameter slab (VMEM-resident across
    the grid); o_ref: (TB, N_VOWELS).  Every op is row-independent, so the
    undefined trailing rows of a partial boundary block are never observable
    (their output columns are masked out of the writeback).
    """
    def param(name):
        r0, nr, nc = _SLAB_LAYOUT[name]
        return p_ref[r0:r0 + nr, :nc]            # static slice: free view load

    dot = functools.partial(jnp.dot, preferred_element_type=jnp.float32,
                            precision=jax.lax.Precision.HIGHEST)

    x = x_ref[...]                                               # (TB, 20)
    h = jnp.maximum(dot(x, param("w1")) + param("b1"), 0.0)      # (TB, 20)
    h = jnp.maximum(dot(h, param("w2")) + param("b2"), 0.0)      # (TB, 12)
    h = jnp.maximum(dot(h, param("w3")) + param("b3"), 0.0)      # (TB, 4)
    logits = dot(h, param("w4")) + param("b4")                   # (TB, 12)

    # Numerically stable softmax over the vowel (lane) axis; rows independent.
    m = jnp.max(logits, axis=-1, keepdims=True)
    e = jnp.exp(logits - m)
    denom = jnp.sum(e, axis=-1, keepdims=True)
    o_ref[...] = (e * pl.reciprocal(denom, approx=False)).astype(o_ref.dtype)


def _num_tensorcores():
    """2 TensorCores per chip on v7x, 1 on v5e/v6e."""
    try:
        kind = jax.devices()[0].device_kind.lower()
    except Exception:
        return 1
    return 2 if ("v7" in kind or "tpu7" in kind) else 1


def _pick_tile(B, batch_tile, num_cores):
    """Largest 8-row batch tile; keep >= num_cores grid steps only on v7x."""
    tile = max(_SUBLANES, (int(batch_tile) // _SUBLANES) * _SUBLANES)
    if num_cores > 1 and B > _SUBLANES:
        per_core = _round_up(pl.cdiv(_round_up(B, _SUBLANES), num_cores), _SUBLANES)
        tile = min(tile, per_core)
    if tile >= B:
        return B          # single full-extent block (always a legal block shape)
    return tile


def timbre_encoder_forward(x, params, *, batch_tile=4096):
    """x: (B, N_MFCC) float32 -> (B, N_VOWELS) softmax probabilities."""
    B, d = x.shape
    assert d == N_MFCC

    slab = pack_params(params)                 # tiny; one VMEM-resident DMA
    tile = _pick_tile(B, batch_tile, _num_tensorcores())
    grid = (pl.cdiv(B, tile),)

    cost = pl.CostEstimate(
        flops=2 * B * (N_MFCC * N_MFCC + N_MFCC * N_HID
                       + N_HID * N_TIMB + N_TIMB * N_VOWELS),
        transcendentals=B * N_VOWELS,
        bytes_accessed=4 * (B * (N_MFCC + N_VOWELS) + slab.size),
    )

    # TODO(synk): verify with xprof on v7x that the single "parallel" axis
    # actually shards across both TensorCores; if not, add an explicit
    # CORE_PARALLEL leading grid axis and split the batch per core.
    return pl.pallas_call(
        _timbre_kernel,
        out_shape=jax.ShapeDtypeStruct((B, N_VOWELS), jnp.float32),
        grid=grid,
        in_specs=[
            pl.BlockSpec((tile, N_MFCC), lambda i: (i, 0)),            # batch tile
            pl.BlockSpec((_SLAB_ROWS, _SLAB_COLS), lambda i: (0, 0)),  # resident params
        ],
        out_specs=pl.BlockSpec((tile, N_VOWELS), lambda i: (i, 0)),
        compiler_params=pltpu.CompilerParams(
            dimension_semantics=("parallel",),
            vmem_limit_bytes=32 * 1024 * 1024,
        ),
        cost_estimate=cost,
    )(x, slab)


def init_params(key):
    """torch.nn.Linear default init (U[-1/sqrt(fan_in), 1/sqrt(fan_in)])."""
    dims = [(N_MFCC, N_MFCC), (N_HID, N_MFCC), (N_TIMB, N_HID), (N_VOWELS, N_TIMB)]
    params = {}
    keys = jax.random.split(key, 2 * len(dims))
    for idx, (fan_out, fan_in) in enumerate(dims):
        bound = 1.0 / float(fan_in) ** 0.5
        params[f"w{idx + 1}"] = jax.random.uniform(
            keys[2 * idx], (fan_out, fan_in), minval=-bound, maxval=bound,
            dtype=jnp.float32)
        params[f"b{idx + 1}"] = jax.random.uniform(
            keys[2 * idx + 1], (fan_out,), minval=-bound, maxval=bound,
            dtype=jnp.float32)
    return params


def reference_forward(x, params):
    dot = functools.partial(jnp.dot, precision=jax.lax.Precision.HIGHEST)
    h = jnp.maximum(dot(x, params["w1"].T) + params["b1"], 0.0)
    h = jnp.maximum(dot(h, params["w2"].T) + params["b2"], 0.0)
    h = jnp.maximum(dot(h, params["w3"].T) + params["b3"], 0.0)
    logits = dot(h, params["w4"].T) + params["b4"]
    return jax.nn.softmax(logits, axis=-1)


if __name__ == "__main__":
    key = jax.random.PRNGKey(0)
    k_param, k_x = jax.random.split(key)

    params = init_params(k_param)
    B = 50  # not a multiple of 8 -> exercises the full-extent single-block path
    x = jax.random.normal(k_x, (B, N_MFCC), dtype=jnp.float32)

    out = jax.block_until_ready(timbre_encoder_forward(x, params))
    ref = reference_forward(x, params)

    assert out.shape == (B, N_VOWELS)
    assert jnp.allclose(out, ref, atol=1e-5, rtol=1e-5), "mismatch vs JAX reference"
    assert jnp.allclose(jnp.sum(out, axis=-1), 1.0, atol=1e-5)

    # Multi-step grid + partial boundary block path (small forced tile).
    out_multi = jax.block_until_ready(
        timbre_encoder_forward(x, params, batch_tile=16))
    assert jnp.allclose(out_multi, ref, atol=1e-5, rtol=1e-5), "boundary-block mismatch"

    print("KERNEL_OK")
</pallas_src>

<mosaic_0001>
module attributes {stable_mosaic.version = 11 : i64} {
  func.func @_timbre_kernel(%arg0: i32, %arg1: memref<50x20xf32, #tpu.memory_space<vmem>>, %arg2: memref<104x20xf32, #tpu.memory_space<vmem>>, %arg3: memref<50x12xf32, #tpu.memory_space<vmem>>) attributes {dimension_semantics = [#tpu.dimension_semantics<parallel>], iteration_bounds = array<i64: 1>, scalar_prefetch = 0 : i64, scratch_operands = 0 : i64, tpu.core_type = #tpu.core_type<tc>, window_params = [{transform_indices = @transform_0, window_bounds = array<i64: 50, 20>}, {pipeline_mode = #tpu.pipeline_mode<synchronous>, transform_indices = @transform_1, window_bounds = array<i64: 104, 20>}, {transform_indices = @transform_2, window_bounds = array<i64: 50, 12>}]} {
    %c0 = arith.constant 0 : index
    %c0_0 = arith.constant 0 : index
    %0 = vector.load %arg1[%c0, %c0_0] : memref<50x20xf32, #tpu.memory_space<vmem>>, vector<50x20xf32>
    %c0_1 = arith.constant 0 : index
    %c0_2 = arith.constant 0 : index
    %1 = vector.load %arg2[%c0_1, %c0_2] : memref<104x20xf32, #tpu.memory_space<vmem>>, vector<20x20xf32>
    %cst = arith.constant dense<0.000000e+00> : vector<50x20xf32>
    %2 = tpu.matmul %0, %1, %cst {dimension_numbers = #tpu.dot_dimension_numbers<[1], [0], [0], [1], [0, 0, 1, 1], [], []>, precision = #tpu.contract_precision<fp32>} : vector<50x20xf32>, vector<20x20xf32>, vector<50x20xf32> -> vector<50x20xf32>
    %c24 = arith.constant 24 : index
    %c0_3 = arith.constant 0 : index
    %3 = vector.load %arg2[%c24, %c0_3] : memref<104x20xf32, #tpu.memory_space<vmem>>, vector<1x20xf32>
    %4 = vector.broadcast %3 : vector<1x20xf32> to vector<50x20xf32>
    %5 = arith.addf %2, %4 : vector<50x20xf32>
    %cst_4 = arith.constant 0.000000e+00 : f32
    %6 = vector.broadcast %cst_4 : f32 to vector<50x20xf32>
    %7 = arith.maximumf %5, %6 : vector<50x20xf32>
    %c32 = arith.constant 32 : index
    %c0_5 = arith.constant 0 : index
    %8 = vector.load %arg2[%c32, %c0_5] : memref<104x20xf32, #tpu.memory_space<vmem>>, vector<20x12xf32>
    %cst_6 = arith.constant dense<0.000000e+00> : vector<50x12xf32>
    %9 = tpu.matmul %7, %8, %cst_6 {dimension_numbers = #tpu.dot_dimension_numbers<[1], [0], [0], [1], [0, 0, 1, 1], [], []>, precision = #tpu.contract_precision<fp32>} : vector<50x20xf32>, vector<20x12xf32>, vector<50x12xf32> -> vector<50x12xf32>
    %c56 = arith.constant 56 : index
    %c0_7 = arith.constant 0 : index
    %10 = vector.load %arg2[%c56, %c0_7] : memref<104x20xf32, #tpu.memory_space<vmem>>, vector<1x12xf32>
    %11 = vector.broadcast %10 : vector<1x12xf32> to vector<50x12xf32>
    %12 = arith.addf %9, %11 : vector<50x12xf32>
    %cst_8 = arith.constant 0.000000e+00 : f32
    %13 = vector.broadcast %cst_8 : f32 to vector<50x12xf32>
    %14 = arith.maximumf %12, %13 : vector<50x12xf32>
    %c64 = arith.constant 64 : index
    %c0_9 = arith.constant 0 : index
    %15 = vector.load %arg2[%c64, %c0_9] : memref<104x20xf32, #tpu.memory_space<vmem>>, vector<12x4xf32>
    %cst_10 = arith.constant dense<0.000000e+00> : vector<50x4xf32>
    %16 = tpu.matmul %14, %15, %cst_10 {dimension_numbers = #tpu.dot_dimension_numbers<[1], [0], [0], [1], [0, 0, 1, 1], [], []>, precision = #tpu.contract_precision<fp32>} : vector<50x12xf32>, vector<12x4xf32>, vector<50x4xf32> -> vector<50x4xf32>
    %c80 = arith.constant 80 : index
    %c0_11 = arith.constant 0 : index
    %17 = vector.load %arg2[%c80, %c0_11] : memref<104x20xf32, #tpu.memory_space<vmem>>, vector<1x4xf32>
    %18 = vector.broadcast %17 : vector<1x4xf32> to vector<50x4xf32>
    %19 = arith.addf %16, %18 : vector<50x4xf32>
    %cst_12 = arith.constant 0.000000e+00 : f32
    %20 = vector.broadcast %cst_12 : f32 to vector<50x4xf32>
    %21 = arith.maximumf %19, %20 : vector<50x4xf32>
    %c88 = arith.constant 88 : index
    %c0_13 = arith.constant 0 : index
    %22 = vector.load %arg2[%c88, %c0_13] : memref<104x20xf32, #tpu.memory_space<vmem>>, vector<4x12xf32>
    %cst_14 = arith.constant dense<0.000000e+00> : vector<50x12xf32>
    %23 = tpu.matmul %21, %22, %cst_14 {dimension_numbers = #tpu.dot_dimension_numbers<[1], [0], [0], [1], [0, 0, 1, 1], [], []>, precision = #tpu.contract_precision<fp32>} : vector<50x4xf32>, vector<4x12xf32>, vector<50x12xf32> -> vector<50x12xf32>
    %c96 = arith.constant 96 : index
    %c0_15 = arith.constant 0 : index
    %24 = vector.load %arg2[%c96, %c0_15] : memref<104x20xf32, #tpu.memory_space<vmem>>, vector<1x12xf32>
    %25 = vector.broadcast %24 : vector<1x12xf32> to vector<50x12xf32>
    %26 = arith.addf %23, %25 : vector<50x12xf32>
    %cst_16 = arith.constant dense<0xFF800000> : vector<50xf32>
    %27 = vector.multi_reduction <maximumf>, %26, %cst_16 [1] : vector<50x12xf32> to vector<50xf32>
    %28 = vector.shape_cast %27 : vector<50xf32> to vector<50x1xf32>
    %29 = vector.broadcast %28 : vector<50x1xf32> to vector<50x12xf32>
    %30 = arith.subf %26, %29 : vector<50x12xf32>
    %31 = math.exp %30 : vector<50x12xf32>
    %cst_17 = arith.constant dense<0.000000e+00> : vector<50xf32>
    %32 = vector.multi_reduction <add>, %31, %cst_17 [1] : vector<50x12xf32> to vector<50xf32>
    %33 = vector.shape_cast %32 : vector<50xf32> to vector<50x1xf32>
    %34 = tpu.reciprocal %33 : vector<50x1xf32> -> vector<50x1xf32>
    %35 = vector.broadcast %34 : vector<50x1xf32> to vector<50x12xf32>
    %36 = arith.mulf %31, %35 : vector<50x12xf32>
    %c0_18 = arith.constant 0 : index
    %c0_19 = arith.constant 0 : index
    %37 = vector.load %arg3[%c0_18, %c0_19] : memref<50x12xf32, #tpu.memory_space<vmem>>, vector<50x12xf32>
    tpu.vector_store %arg3[%c0_18, %c0_19], %36 {strides = array<i32>} : memref<50x12xf32, #tpu.memory_space<vmem>>, vector<50x12xf32>,
    return
  }
  func.func @transform_0(%arg0: i32) -> (i32, i32) {
    %c0_i32 = arith.constant 0 : i32
    %c0_i32_0 = arith.constant 0 : i32
    return %arg0, %c0_i32 : i32, i32
  }
  func.func @transform_1(%arg0: i32) -> (i32, i32) {
    %c0_i32 = arith.constant 0 : i32
    %c0_i32_0 = arith.constant 0 : i32
    %c0_i32_1 = arith.constant 0 : i32
    return %c0_i32, %c0_i32_0 : i32, i32
  }
  func.func @transform_2(%arg0: i32) -> (i32, i32) {
    %c0_i32 = arith.constant 0 : i32
    %c0_i32_0 = arith.constant 0 : i32
    return %arg0, %c0_i32 : i32, i32
  }
}

</mosaic_0001>

<llo_original>
// kernel: tpu_custom_call.1
$region0: #{tpu_custom_call.1}
  #allocation0 [shape = 'u32[]', space=smem, size = 0x4, offset = 0x4, fixed_abs, tag = 'smem constant byte address 0x4 - core index']
  #allocation1 [shape = 'u32[72,128]{1,0:T(1,128)}', space=vmem, size = 0x9000, scoped, tag = 'internal scratch']
  %s0 = inlined_call_operand.vmem [shape: f32[50,20], index: 0, kind: input, shape index: {}]
  %s1 = inlined_call_operand.vmem [shape: f32[104,20], index: 1, kind: input, shape index: {}]
  %s2 = inlined_call_operand.vmem [shape: f32[50,12], index: 2, kind: output, shape index: {}]
  %s3 = sld [smem:[#allocation0]]
  $region18: #{tpu_custom_call.1} parent=0
    _
  %s5 = ssub.s32 1, %s3
  %s6 = scalar_select 0, %s5, %s3
  // Predicated region
  $region2: #{tpu_custom_call.1} parent=0 // pred_check
    _
  $region3: #{tpu_custom_call.1} parent=0 // pred_check_branch
    %8 = sbr.rel (0) target = $region5
  $region4: #{tpu_custom_call.1} parent=0 // pred_region
    _
  $region5: #{tpu_custom_call.1} parent=0 // pred_fallthru
    _
  // Predicated region
  $region6: #{tpu_custom_call.1} parent=0 // pred_check
    _
  $region7: #{tpu_custom_call.1} parent=0 // pred_check_branch
    %10 = sbr.rel (0) target = $region9
  $region8: #{tpu_custom_call.1} parent=0 // pred_region
    _
  $region9: #{tpu_custom_call.1} parent=0 // pred_fallthru
    _
  %v11 = vld [vmem:[%s0] sm:$0xff]
  %v12 = vld [vmem:[%s0 + $0x8] sm:$0xff]
  %v13 = vld [vmem:[%s0 + $0x10] sm:$0xff]
  %v14 = vld [vmem:[%s0 + $0x18] sm:$0xff]
  %v15 = vld [vmem:[%s0 + $0x20] sm:$0xff]
  %v16 = vld [vmem:[%s0 + $0x28] sm:$0xff]
  %v17 = vld [vmem:[%s0 + $0x30] sm:$0x3]
  %v18 = vld [vmem:[%s1] sm:$0xff]
  %v19 = vld [vmem:[%s1 + $0x8] sm:$0xff]
  %v20 = vld [vmem:[%s1 + $0x10] sm:$0xf]
  %v21 = vld [vmem:[%s1 + $0x18] sm:$0x1]
  %v22 = vperm.slane %v21, 0
  %vm23 = vcmask 162816
  %v25 = vsel %vm23, %v11, 0
  %v28 = vsel %vm23, %v12, 0
  %v31 = vsel %vm23, %v13, 0
  %v34 = vsel %vm23, %v14, 0
  %v37 = vsel %vm23, %v15, 0
  %v40 = vsel %vm23, %v16, 0
  %v43 = vsel %vm23, %v17, 0
  %vm45 = vcmask 1043456
  %v47 = vsel %vm45, %v20, 0
  %49 = vmatpush.msra.mxu0 0.0
  %50 = vmatpush.msra.mxu0 0.0
  %51 = vmatpush.msra.mxu0 0.0
  %52 = vmatpush.msra.mxu0 0.0
  %53 = vmatpush.msra.mxu0 0.0
  %54 = vmatpush.msra.mxu0 0.0
  %55 = vmatpush.msra.mxu0 0.0
  %56 = vmatpush.msra.mxu0 0.0
  %57 = vmatpush.msra.mxu0 0.0
  %58 = vmatpush.msra.mxu0 0.0
  %59 = vmatpush.msra.mxu0 0.0
  %60 = vmatpush.msra.mxu0 0.0
  %61 = vmatpush.msra.mxu0 0.0
  %v62 = vand.u32 %v47, 4294901760
  %63 = vmatpush.msra.mxu0 %v62
  %v64 = vand.u32 %v19, 4294901760
  %65 = vmatpush.msra.mxu0 %v64
  %v66 = vand.u32 %v18, 4294901760
  %67 = vmatpush.msra.mxu0 %v66
  %v68 = vand.u32 %v25, 4294901760
  %v69 = vsub.f32 %v25, %v68
  %v70 = vand.u32 %v69, 4294901760
  %v71 = vsub.f32 %v69, %v70
  %v72 = vand.u32 %v71, 4294901760
  %73 = vmatmul.f32.gmra.mxu0 %v72
  %v74 = vpop.f32.mrf.mxu0
  %v75 = vadd.f32 %v22, %v74
  %v76 = vand.u32 %v28, 4294901760
  %v77 = vsub.f32 %v28, %v76
  %v78 = vand.u32 %v77, 4294901760
  %v79 = vsub.f32 %v77, %v78
  %v80 = vand.u32 %v79, 4294901760
  %81 = vmatmul.f32.gmra.mxu0 %v80
  %v82 = vpop.f32.mrf.mxu0
  %v83 = vadd.f32 %v22, %v82
  %v84 = vand.u32 %v31, 4294901760
  %v85 = vsub.f32 %v31, %v84
  %v86 = vand.u32 %v85, 4294901760
  %v87 = vsub.f32 %v85, %v86
  %v88 = vand.u32 %v87, 4294901760
  %89 = vmatmul.f32.gmra.mxu0 %v88
  %v90 = vpop.f32.mrf.mxu0
  %v91 = vadd.f32 %v22, %v90
  %v92 = vand.u32 %v34, 4294901760
  %v93 = vsub.f32 %v34, %v92
  %v94 = vand.u32 %v93, 4294901760
  %v95 = vsub.f32 %v93, %v94
  %v96 = vand.u32 %v95, 4294901760
  %97 = vmatmul.f32.gmra.mxu0 %v96
  %v98 = vpop.f32.mrf.mxu0
  %v99 = vadd.f32 %v22, %v98
  %v100 = vand.u32 %v37, 4294901760
  %v101 = vsub.f32 %v37, %v100
  %v102 = vand.u32 %v101, 4294901760
  %v103 = vsub.f32 %v101, %v102
  %v104 = vand.u32 %v103, 4294901760
  %105 = vmatmul.f32.gmra.mxu0 %v104
  %v106 = vpop.f32.mrf.mxu0
  %v107 = vadd.f32 %v22, %v106
  %v108 = vand.u32 %v40, 4294901760
  %v109 = vsub.f32 %v40, %v108
  %v110 = vand.u32 %v109, 4294901760
  %v111 = vsub.f32 %v109, %v110
  %v112 = vand.u32 %v111, 4294901760
  %113 = vmatmul.f32.gmra.mxu0 %v112
  %v114 = vpop.f32.mrf.mxu0
  %v115 = vadd.f32 %v22, %v114
  %v116 = vand.u32 %v43, 4294901760
  %v117 = vsub.f32 %v43, %v116
  %v118 = vand.u32 %v117, 4294901760
  %v119 = vsub.f32 %v117, %v118
  %v120 = vand.u32 %v119, 4294901760
  %121 = vmatmul.f32.gmra.mxu0 %v120
  %v122 = vpop.f32.mrf.mxu0
  %v123 = vadd.f32 %v22, %v122
  %124 = vdwg.mxu0
  %125 = vmatpush.msra.mxu0 0.0
  %126 = vmatpush.msra.mxu0 0.0
  %127 = vmatpush.msra.mxu0 0.0
  %128 = vmatpush.msra.mxu0 0.0
  %129 = vmatpush.msra.mxu0 0.0
  %130 = vmatpush.msra.mxu0 0.0
  %131 = vmatpush.msra.mxu0 0.0
  %132 = vmatpush.msra.mxu0 0.0
  %133 = vmatpush.msra.mxu0 0.0
  %134 = vmatpush.msra.mxu0 0.0
  %135 = vmatpush.msra.mxu0 0.0
  %136 = vmatpush.msra.mxu0 0.0
  %137 = vmatpush.msra.mxu0 0.0
  %v138 = vand.u32 %v47, 4294901760
  %v139 = vsub.f32 %v47, %v138
  %v140 = vand.u32 %v139, 4294901760
  %v141 = vsub.f32 %v139, %v140
  %v142 = vand.u32 %v141, 4294901760
  %143 = vmatpush.msra.mxu0 %v142
  %v144 = vand.u32 %v19, 4294901760
  %v145 = vsub.f32 %v19, %v144
  %v146 = vand.u32 %v145, 4294901760
  %v147 = vsub.f32 %v145, %v146
  %v148 = vand.u32 %v147, 4294901760
  %149 = vmatpush.msra.mxu0 %v148
  %v150 = vand.u32 %v18, 4294901760
  %v151 = vsub.f32 %v18, %v150
  %v152 = vand.u32 %v151, 4294901760
  %v153 = vsub.f32 %v151, %v152
  %v154 = vand.u32 %v153, 4294901760
  %155 = vmatpush.msra.mxu0 %v154
  %v156 = vand.u32 %v25, 4294901760
  %157 = vmatmul.f32.gmra.mxu0 %v156
  %v158 = vpop.f32.mrf.mxu0
  %v159 = vadd.f32 %v75, %v158
  %v160 = vand.u32 %v28, 4294901760
  %161 = vmatmul.f32.gmra.mxu0 %v160
  %v162 = vpop.f32.mrf.mxu0
  %v163 = vadd.f32 %v83, %v162
  %v164 = vand.u32 %v31, 4294901760
  %165 = vmatmul.f32.gmra.mxu0 %v164
  %v166 = vpop.f32.mrf.mxu0
  %v167 = vadd.f32 %v91, %v166
  %v168 = vand.u32 %v34, 4294901760
  %169 = vmatmul.f32.gmra.mxu0 %v168
  %v170 = vpop.f32.mrf.mxu0
  %v171 = vadd.f32 %v99, %v170
  %v172 = vand.u32 %v37, 4294901760
  %173 = vmatmul.f32.gmra.mxu0 %v172
  %v174 = vpop.f32.mrf.mxu0
  %v175 = vadd.f32 %v107, %v174
  %v176 = vand.u32 %v40, 4294901760
  %177 = vmatmul.f32.gmra.mxu0 %v176
  %v178 = vpop.f32.mrf.mxu0
  %v179 = vadd.f32 %v115, %v178
  %v180 = vand.u32 %v43, 4294901760
  %181 = vmatmul.f32.gmra.mxu0 %v180
  %v182 = vpop.f32.mrf.mxu0
  %v183 = vadd.f32 %v123, %v182
  %184 = vdwg.mxu0
  %185 = vmatpush.msra.mxu0 0.0
  %186 = vmatpush.msra.mxu0 0.0
  %187 = vmatpush.msra.mxu0 0.0
  %188 = vmatpush.msra.mxu0 0.0
  %189 = vmatpush.msra.mxu0 0.0
  %190 = vmatpush.msra.mxu0 0.0
  %191 = vmatpush.msra.mxu0 0.0
  %192 = vmatpush.msra.mxu0 0.0
  %193 = vmatpush.msra.mxu0 0.0
  %194 = vmatpush.msra.mxu0 0.0
  %195 = vmatpush.msra.mxu0 0.0
  %196 = vmatpush.msra.mxu0 0.0
  %197 = vmatpush.msra.mxu0 0.0
  %v198 = vand.u32 %v47, 4294901760
  %v199 = vsub.f32 %v47, %v198
  %200 = vmatpush.msra.mxu0 %v199
  %v201 = vand.u32 %v19, 4294901760
  %v202 = vsub.f32 %v19, %v201
  %203 = vmatpush.msra.mxu0 %v202
  %v204 = vand.u32 %v18, 4294901760
  %v205 = vsub.f32 %v18, %v204
  %206 = vmatpush.msra.mxu0 %v205
  %v207 = vand.u32 %v25, 4294901760
  %v208 = vsub.f32 %v25, %v207
  %209 = vmatmul.f32.gmra.mxu0 %v208
  %v210 = vpop.f32.mrf.mxu0
  %v211 = vadd.f32 %v159, %v210
  %v212 = vand.u32 %v28, 4294901760
  %v213 = vsub.f32 %v28, %v212
  %214 = vmatmul.f32.gmra.mxu0 %v213
  %v215 = vpop.f32.mrf.mxu0
  %v216 = vadd.f32 %v163, %v215
  %v217 = vand.u32 %v31, 4294901760
  %v218 = vsub.f32 %v31, %v217
  %219 = vmatmul.f32.gmra.mxu0 %v218
  %v220 = vpop.f32.mrf.mxu0
  %v221 = vadd.f32 %v167, %v220
  %v222 = vand.u32 %v34, 4294901760
  %v223 = vsub.f32 %v34, %v222
  %224 = vmatmul.f32.gmra.mxu0 %v223
  %v225 = vpop.f32.mrf.mxu0
  %v226 = vadd.f32 %v171, %v225
  %v227 = vand.u32 %v37, 4294901760
  %v228 = vsub.f32 %v37, %v227
  %229 = vmatmul.f32.gmra.mxu0 %v228
  %v230 = vpop.f32.mrf.mxu0
  %v231 = vadd.f32 %v175, %v230
  %v232 = vand.u32 %v40, 4294901760
  %v233 = vsub.f32 %v40, %v232
  %234 = vmatmul.f32.gmra.mxu0 %v233
  %v235 = vpop.f32.mrf.mxu0
  %v236 = vadd.f32 %v179, %v235
  %v237 = vand.u32 %v43, 4294901760
  %v238 = vsub.f32 %v43, %v237
  %239 = vmatmul.f32.gmra.mxu0 %v238
  %v240 = vpop.f32.mrf.mxu0
  %v241 = vadd.f32 %v183, %v240
  %242 = vdwg.mxu0
  %243 = vmatpush.msra.mxu0 0.0
  %244 = vmatpush.msra.mxu0 0.0
  %245 = vmatpush.msra.mxu0 0.0
  %246 = vmatpush.msra.mxu0 0.0
  %247 = vmatpush.msra.mxu0 0.0
  %248 = vmatpush.msra.mxu0 0.0
  %249 = vmatpush.msra.mxu0 0.0
  %250 = vmatpush.msra.mxu0 0.0
  %251 = vmatpush.msra.mxu0 0.0
  %252 = vmatpush.msra.mxu0 0.0
  %253 = vmatpush.msra.mxu0 0.0
  %254 = vmatpush.msra.mxu0 0.0
  %255 = vmatpush.msra.mxu0 0.0
  %v256 = vand.u32 %v47, 4294901760
  %257 = vmatpush.msra.mxu0 %v256
  %v258 = vand.u32 %v19, 4294901760
  %259 = vmatpush.msra.mxu0 %v258
  %v260 = vand.u32 %v18, 4294901760
  %261 = vmatpush.msra.mxu0 %v260
  %v262 = vand.u32 %v25, 4294901760
  %v263 = vsub.f32 %v25, %v262
  %v264 = vand.u32 %v263, 4294901760
  %265 = vmatmul.f32.gmra.mxu0 %v264
  %v266 = vpop.f32.mrf.mxu0
  %v267 = vadd.f32 %v211, %v266
  %v268 = vand.u32 %v28, 4294901760
  %v269 = vsub.f32 %v28, %v268
  %v270 = vand.u32 %v269, 4294901760
  %271 = vmatmul.f32.gmra.mxu0 %v270
  %v272 = vpop.f32.mrf.mxu0
  %v273 = vadd.f32 %v216, %v272
  %v274 = vand.u32 %v31, 4294901760
  %v275 = vsub.f32 %v31, %v274
  %v276 = vand.u32 %v275, 4294901760
  %277 = vmatmul.f32.gmra.mxu0 %v276
  %v278 = vpop.f32.mrf.mxu0
  %v279 = vadd.f32 %v221, %v278
  %v280 = vand.u32 %v34, 4294901760
  %v281 = vsub.f32 %v34, %v280
  %v282 = vand.u32 %v281, 4294901760
  %283 = vmatmul.f32.gmra.mxu0 %v282
  %v284 = vpop.f32.mrf.mxu0
  %v285 = vadd.f32 %v226, %v284
  %v286 = vand.u32 %v37, 4294901760
  %v287 = vsub.f32 %v37, %v286
  %v288 = vand.u32 %v287, 4294901760
  %289 = vmatmul.f32.gmra.mxu0 %v288
  %v290 = vpop.f32.mrf.mxu0
  %v291 = vadd.f32 %v231, %v290
  %v292 = vand.u32 %v40, 4294901760
  %v293 = vsub.f32 %v40, %v292
  %v294 = vand.u32 %v293, 4294901760
  %295 = vmatmul.f32.gmra.mxu0 %v294
  %v296 = vpop.f32.mrf.mxu0
  %v297 = vadd.f32 %v236, %v296
  %v298 = vand.u32 %v43, 4294901760
  %v299 = vsub.f32 %v43, %v298
  %v300 = vand.u32 %v299, 4294901760
  %301 = vmatmul.f32.gmra.mxu0 %v300
  %v302 = vpop.f32.mrf.mxu0
  %v303 = vadd.f32 %v241, %v302
  %304 = vdwg.mxu0
  %305 = vmatpush.msra.mxu0 0.0
  %306 = vmatpush.msra.mxu0 0.0
  %307 = vmatpush.msra.mxu0 0.0
  %308 = vmatpush.msra.mxu0 0.0
  %309 = vmatpush.msra.mxu0 0.0
  %310 = vmatpush.msra.mxu0 0.0
  %311 = vmatpush.msra.mxu0 0.0
  %312 = vmatpush.msra.mxu0 0.0
  %313 = vmatpush.msra.mxu0 0.0
  %314 = vmatpush.msra.mxu0 0.0
  %315 = vmatpush.msra.mxu0 0.0
  %316 = vmatpush.msra.mxu0 0.0
  %317 = vmatpush.msra.mxu0 0.0
  %v318 = vand.u32 %v47, 4294901760
  %v319 = vsub.f32 %v47, %v318
  %v320 = vand.u32 %v319, 4294901760
  %321 = vmatpush.msra.mxu0 %v320
  %v322 = vand.u32 %v19, 4294901760
  %v323 = vsub.f32 %v19, %v322
  %v324 = vand.u32 %v323, 4294901760
  %325 = vmatpush.msra.mxu0 %v324
  %v326 = vand.u32 %v18, 4294901760
  %v327 = vsub.f32 %v18, %v326
  %v328 = vand.u32 %v327, 4294901760
  %329 = vmatpush.msra.mxu0 %v328
  %v330 = vand.u32 %v25, 4294901760
  %331 = vmatmul.f32.gmra.mxu0 %v330
  %v332 = vpop.f32.mrf.mxu0
  %v333 = vadd.f32 %v267, %v332
  %v334 = vand.u32 %v28, 4294901760
  %335 = vmatmul.f32.gmra.mxu0 %v334
  %v336 = vpop.f32.mrf.mxu0
  %v337 = vadd.f32 %v273, %v336
  %v338 = vand.u32 %v31, 4294901760
  %339 = vmatmul.f32.gmra.mxu0 %v338
  %v340 = vpop.f32.mrf.mxu0
  %v341 = vadd.f32 %v279, %v340
  %v342 = vand.u32 %v34, 4294901760
  %343 = vmatmul.f32.gmra.mxu0 %v342
  %v344 = vpop.f32.mrf.mxu0
  %v345 = vadd.f32 %v285, %v344
  %v346 = vand.u32 %v37, 4294901760
  %347 = vmatmul.f32.gmra.mxu0 %v346
  %v348 = vpop.f32.mrf.mxu0
  %v349 = vadd.f32 %v291, %v348
  %v350 = vand.u32 %v40, 4294901760
  %351 = vmatmul.f32.gmra.mxu0 %v350
  %v352 = vpop.f32.mrf.mxu0
  %v353 = vadd.f32 %v297, %v352
  %v354 = vand.u32 %v43, 4294901760
  %355 = vmatmul.f32.gmra.mxu0 %v354
  %v356 = vpop.f32.mrf.mxu0
  %v357 = vadd.f32 %v303, %v356
  %358 = vdwg.mxu0
  %359 = vmatpush.msra.mxu0 0.0
  %360 = vmatpush.msra.mxu0 0.0
  %361 = vmatpush.msra.mxu0 0.0
  %362 = vmatpush.msra.mxu0 0.0
  %363 = vmatpush.msra.mxu0 0.0
  %364 = vmatpush.msra.mxu0 0.0
  %365 = vmatpush.msra.mxu0 0.0
  %366 = vmatpush.msra.mxu0 0.0
  %367 = vmatpush.msra.mxu0 0.0
  %368 = vmatpush.msra.mxu0 0.0
  %369 = vmatpush.msra.mxu0 0.0
  %370 = vmatpush.msra.mxu0 0.0
  %371 = vmatpush.msra.mxu0 0.0
  %v372 = vand.u32 %v47, 4294901760
  %373 = vmatpush.msra.mxu0 %v372
  %v374 = vand.u32 %v19, 4294901760
  %375 = vmatpush.msra.mxu0 %v374
  %v376 = vand.u32 %v18, 4294901760
  %377 = vmatpush.msra.mxu0 %v376
  %v378 = vand.u32 %v25, 4294901760
  %379 = vmatmul.f32.gmra.mxu0 %v378
  %v380 = vpop.f32.mrf.mxu0
  %v381 = vadd.f32 %v333, %v380
  %v382 = vand.u32 %v28, 4294901760
  %383 = vmatmul.f32.gmra.mxu0 %v382
  %v384 = vpop.f32.mrf.mxu0
  %v385 = vadd.f32 %v337, %v384
  %v386 = vand.u32 %v31, 4294901760
  %387 = vmatmul.f32.gmra.mxu0 %v386
  %v388 = vpop.f32.mrf.mxu0
  %v389 = vadd.f32 %v341, %v388
  %v390 = vand.u32 %v34, 4294901760
  %391 = vmatmul.f32.gmra.mxu0 %v390
  %v392 = vpop.f32.mrf.mxu0
  %v393 = vadd.f32 %v345, %v392
  %v394 = vand.u32 %v37, 4294901760
  %395 = vmatmul.f32.gmra.mxu0 %v394
  %v396 = vpop.f32.mrf.mxu0
  %v397 = vadd.f32 %v349, %v396
  %v398 = vand.u32 %v40, 4294901760
  %399 = vmatmul.f32.gmra.mxu0 %v398
  %v400 = vpop.f32.mrf.mxu0
  %v401 = vadd.f32 %v353, %v400
  %v402 = vand.u32 %v43, 4294901760
  %403 = vmatmul.f32.gmra.mxu0 %v402
  %v404 = vpop.f32.mrf.mxu0
  %v405 = vadd.f32 %v357, %v404
  %406 = vdwg.mxu0
  %v407 = vmax.f32 %v381, 0.0
  %v408 = vmax.f32 %v385, 0.0
  %v409 = vmax.f32 %v389, 0.0
  %v410 = vmax.f32 %v393, 0.0
  %v411 = vmax.f32 %v397, 0.0
  %v412 = vmax.f32 %v401, 0.0
  %v413 = vmax.f32 %v405, 0.0
  %v414 = vld [vmem:[%s1 + $0x20] sm:$0xff]
  %v415 = vld [vmem:[%s1 + $0x28] sm:$0xff]
  %v416 = vld [vmem:[%s1 + $0x30] sm:$0xf]
  %v417 = vld [vmem:[%s1 + $0x38] sm:$0x1]
  %v418 = vperm.slane %v417, 0
  %v420 = vsel %vm23, %v407, 0
  %v423 = vsel %vm23, %v408, 0
  %v426 = vsel %vm23, %v409, 0
  %v429 = vsel %vm23, %v410, 0
  %v432 = vsel %vm23, %v411, 0
  %v435 = vsel %vm23, %v412, 0
  %v438 = vsel %vm23, %v413, 0
  %v441 = vsel %vm45, %v416, 0
  %443 = vmatpush.msra.mxu0 0.0
  %444 = vmatpush.msra.mxu0 0.0
  %445 = vmatpush.msra.mxu0 0.0
  %446 = vmatpush.msra.mxu0 0.0
  %447 = vmatpush.msra.mxu0 0.0
  %448 = vmatpush.msra.mxu0 0.0
  %449 = vmatpush.msra.mxu0 0.0
  %450 = vmatpush.msra.mxu0 0.0
  %451 = vmatpush.msra.mxu0 0.0
  %452 = vmatpush.msra.mxu0 0.0
  %453 = vmatpush.msra.mxu0 0.0
  %454 = vmatpush.msra.mxu0 0.0
  %455 = vmatpush.msra.mxu0 0.0
  %v456 = vand.u32 %v441, 4294901760
  %457 = vmatpush.msra.mxu0 %v456
  %v458 = vand.u32 %v415, 4294901760
  %459 = vmatpush.msra.mxu0 %v458
  %v460 = vand.u32 %v414, 4294901760
  %461 = vmatpush.msra.mxu0 %v460
  %v462 = vand.u32 %v420, 4294901760
  %v463 = vsub.f32 %v420, %v462
  %v464 = vand.u32 %v463, 4294901760
  %v465 = vsub.f32 %v463, %v464
  %v466 = vand.u32 %v465, 4294901760
  %467 = vmatmul.f32.gmra.mxu0 %v466
  %v468 = vpop.f32.mrf.mxu0
  %v469 = vadd.f32 %v418, %v468
  %v470 = vand.u32 %v423, 4294901760
  %v471 = vsub.f32 %v423, %v470
  %v472 = vand.u32 %v471, 4294901760
  %v473 = vsub.f32 %v471, %v472
  %v474 = vand.u32 %v473, 4294901760
  %475 = vmatmul.f32.gmra.mxu0 %v474
  %v476 = vpop.f32.mrf.mxu0
  %v477 = vadd.f32 %v418, %v476
  %v478 = vand.u32 %v426, 4294901760
  %v479 = vsub.f32 %v426, %v478
  %v480 = vand.u32 %v479, 4294901760
  %v481 = vsub.f32 %v479, %v480
  %v482 = vand.u32 %v481, 4294901760
  %483 = vmatmul.f32.gmra.mxu0 %v482
  %v484 = vpop.f32.mrf.mxu0
  %v485 = vadd.f32 %v418, %v484
  %v486 = vand.u32 %v429, 4294901760
  %v487 = vsub.f32 %v429, %v486
  %v488 = vand.u32 %v487, 4294901760
  %v489 = vsub.f32 %v487, %v488
  %v490 = vand.u32 %v489, 4294901760
  %491 = vmatmul.f32.gmra.mxu0 %v490
  %v492 = vpop.f32.mrf.mxu0
  %v493 = vadd.f32 %v418, %v492
  %v494 = vand.u32 %v432, 4294901760
  %v495 = vsub.f32 %v432, %v494
  %v496 = vand.u32 %v495, 4294901760
  %v497 = vsub.f32 %v495, %v496
  %v498 = vand.u32 %v497, 4294901760
  %499 = vmatmul.f32.gmra.mxu0 %v498
  %v500 = vpop.f32.mrf.mxu0
  %v501 = vadd.f32 %v418, %v500
  %v502 = vand.u32 %v435, 4294901760
  %v503 = vsub.f32 %v435, %v502
  %v504 = vand.u32 %v503, 4294901760
  %v505 = vsub.f32 %v503, %v504
  %v506 = vand.u32 %v505, 4294901760
  %507 = vmatmul.f32.gmra.mxu0 %v506
  %v508 = vpop.f32.mrf.mxu0
  %v509 = vadd.f32 %v418, %v508
  %v510 = vand.u32 %v438, 4294901760
  %v511 = vsub.f32 %v438, %v510
  %v512 = vand.u32 %v511, 4294901760
  %v513 = vsub.f32 %v511, %v512
  %v514 = vand.u32 %v513, 4294901760
  %515 = vmatmul.f32.gmra.mxu0 %v514
  %v516 = vpop.f32.mrf.mxu0
  %v517 = vadd.f32 %v418, %v516
  %518 = vdwg.mxu0
  %519 = vmatpush.msra.mxu0 0.0
  %520 = vmatpush.msra.mxu0 0.0
  %521 = vmatpush.msra.mxu0 0.0
  %522 = vmatpush.msra.mxu0 0.0
  %523 = vmatpush.msra.mxu0 0.0
  %524 = vmatpush.msra.mxu0 0.0
  %525 = vmatpush.msra.mxu0 0.0
  %526 = vmatpush.msra.mxu0 0.0
  %527 = vmatpush.msra.mxu0 0.0
  %528 = vmatpush.msra.mxu0 0.0
  %529 = vmatpush.msra.mxu0 0.0
  %530 = vmatpush.msra.mxu0 0.0
  %531 = vmatpush.msra.mxu0 0.0
  %v532 = vand.u32 %v441, 4294901760
  %v533 = vsub.f32 %v441, %v532
  %v534 = vand.u32 %v533, 4294901760
  %v535 = vsub.f32 %v533, %v534
  %v536 = vand.u32 %v535, 4294901760
  %537 = vmatpush.msra.mxu0 %v536
  %v538 = vand.u32 %v415, 4294901760
  %v539 = vsub.f32 %v415, %v538
  %v540 = vand.u32 %v539, 4294901760
  %v541 = vsub.f32 %v539, %v540
  %v542 = vand.u32 %v541, 4294901760
  %543 = vmatpush.msra.mxu0 %v542
  %v544 = vand.u32 %v414, 4294901760
  %v545 = vsub.f32 %v414, %v544
  %v546 = vand.u32 %v545, 4294901760
  %v547 = vsub.f32 %v545, %v546
  %v548 = vand.u32 %v547, 4294901760
  %549 = vmatpush.msra.mxu0 %v548
  %v550 = vand.u32 %v420, 4294901760
  %551 = vmatmul.f32.gmra.mxu0 %v550
  %v552 = vpop.f32.mrf.mxu0
  %v553 = vadd.f32 %v469, %v552
  %v554 = vand.u32 %v423, 4294901760
  %555 = vmatmul.f32.gmra.mxu0 %v554
  %v556 = vpop.f32.mrf.mxu0
  %v557 = vadd.f32 %v477, %v556
  %v558 = vand.u32 %v426, 4294901760
  %559 = vmatmul.f32.gmra.mxu0 %v558
  %v560 = vpop.f32.mrf.mxu0
  %v561 = vadd.f32 %v485, %v560
  %v562 = vand.u32 %v429, 4294901760
  %563 = vmatmul.f32.gmra.mxu0 %v562
  %v564 = vpop.f32.mrf.mxu0
  %v565 = vadd.f32 %v493, %v564
  %v566 = vand.u32 %v432, 4294901760
  %567 = vmatmul.f32.gmra.mxu0 %v566
  %v568 = vpop.f32.mrf.mxu0
  %v569 = vadd.f32 %v501, %v568
  %v570 = vand.u32 %v435, 4294901760
  %571 = vmatmul.f32.gmra.mxu0 %v570
  %v572 = vpop.f32.mrf.mxu0
  %v573 = vadd.f32 %v509, %v572
  %v574 = vand.u32 %v438, 4294901760
  %575 = vmatmul.f32.gmra.mxu0 %v574
  %v576 = vpop.f32.mrf.mxu0
  %v577 = vadd.f32 %v517, %v576
  %578 = vdwg.mxu0
  %579 = vmatpush.msra.mxu0 0.0
  %580 = vmatpush.msra.mxu0 0.0
  %581 = vmatpush.msra.mxu0 0.0
  %582 = vmatpush.msra.mxu0 0.0
  %583 = vmatpush.msra.mxu0 0.0
  %584 = vmatpush.msra.mxu0 0.0
  %585 = vmatpush.msra.mxu0 0.0
  %586 = vmatpush.msra.mxu0 0.0
  %587 = vmatpush.msra.mxu0 0.0
  %588 = vmatpush.msra.mxu0 0.0
  %589 = vmatpush.msra.mxu0 0.0
  %590 = vmatpush.msra.mxu0 0.0
  %591 = vmatpush.msra.mxu0 0.0
  %v592 = vand.u32 %v441, 4294901760
  %v593 = vsub.f32 %v441, %v592
  %594 = vmatpush.msra.mxu0 %v593
  %v595 = vand.u32 %v415, 4294901760
  %v596 = vsub.f32 %v415, %v595
  %597 = vmatpush.msra.mxu0 %v596
  %v598 = vand.u32 %v414, 4294901760
  %v599 = vsub.f32 %v414, %v598
  %600 = vmatpush.msra.mxu0 %v599
  %v601 = vand.u32 %v420, 4294901760
  %v602 = vsub.f32 %v420, %v601
  %603 = vmatmul.f32.gmra.mxu0 %v602
  %v604 = vpop.f32.mrf.mxu0
  %v605 = vadd.f32 %v553, %v604
  %v606 = vand.u32 %v423, 4294901760
  %v607 = vsub.f32 %v423, %v606
  %608 = vmatmul.f32.gmra.mxu0 %v607
  %v609 = vpop.f32.mrf.mxu0
  %v610 = vadd.f32 %v557, %v609
  %v611 = vand.u32 %v426, 4294901760
  %v612 = vsub.f32 %v426, %v611
  %613 = vmatmul.f32.gmra.mxu0 %v612
  %v614 = vpop.f32.mrf.mxu0
  %v615 = vadd.f32 %v561, %v614
  %v616 = vand.u32 %v429, 4294901760
  %v617 = vsub.f32 %v429, %v616
  %618 = vmatmul.f32.gmra.mxu0 %v617
  %v619 = vpop.f32.mrf.mxu0
  %v620 = vadd.f32 %v565, %v619
  %v621 = vand.u32 %v432, 4294901760
  %v622 = vsub.f32 %v432, %v621
  %623 = vmatmul.f32.gmra.mxu0 %v622
  %v624 = vpop.f32.mrf.mxu0
  %v625 = vadd.f32 %v569, %v624
  %v626 = vand.u32 %v435, 4294901760
  %v627 = vsub.f32 %v435, %v626
  %628 = vmatmul.f32.gmra.mxu0 %v627
  %v629 = vpop.f32.mrf.mxu0
  %v630 = vadd.f32 %v573, %v629
  %v631 = vand.u32 %v438, 4294901760
  %v632 = vsub.f32 %v438, %v631
  %633 = vmatmul.f32.gmra.mxu0 %v632
  %v634 = vpop.f32.mrf.mxu0
  %v635 = vadd.f32 %v577, %v634
  %636 = vdwg.mxu0
  %637 = vmatpush.msra.mxu0 0.0
  %638 = vmatpush.msra.mxu0 0.0
  %639 = vmatpush.msra.mxu0 0.0
  %640 = vmatpush.msra.mxu0 0.0
  %641 = vmatpush.msra.mxu0 0.0
  %642 = vmatpush.msra.mxu0 0.0
  %643 = vmatpush.msra.mxu0 0.0
  %644 = vmatpush.msra.mxu0 0.0
  %645 = vmatpush.msra.mxu0 0.0
  %646 = vmatpush.msra.mxu0 0.0
  %647 = vmatpush.msra.mxu0 0.0
  %648 = vmatpush.msra.mxu0 0.0
  %649 = vmatpush.msra.mxu0 0.0
  %v650 = vand.u32 %v441, 4294901760
  %651 = vmatpush.msra.mxu0 %v650
  %v652 = vand.u32 %v415, 4294901760
  %653 = vmatpush.msra.mxu0 %v652
  %v654 = vand.u32 %v414, 4294901760
  %655 = vmatpush.msra.mxu0 %v654
  %v656 = vand.u32 %v420, 4294901760
  %v657 = vsub.f32 %v420, %v656
  %v658 = vand.u32 %v657, 4294901760
  %659 = vmatmul.f32.gmra.mxu0 %v658
  %v660 = vpop.f32.mrf.mxu0
  %v661 = vadd.f32 %v605, %v660
  %v662 = vand.u32 %v423, 4294901760
  %v663 = vsub.f32 %v423, %v662
  %v664 = vand.u32 %v663, 4294901760
  %665 = vmatmul.f32.gmra.mxu0 %v664
  %v666 = vpop.f32.mrf.mxu0
  %v667 = vadd.f32 %v610, %v666
  %v668 = vand.u32 %v426, 4294901760
  %v669 = vsub.f32 %v426, %v668
  %v670 = vand.u32 %v669, 4294901760
  %671 = vmatmul.f32.gmra.mxu0 %v670
  %v672 = vpop.f32.mrf.mxu0
  %v673 = vadd.f32 %v615, %v672
  %v674 = vand.u32 %v429, 4294901760
  %v675 = vsub.f32 %v429, %v674
  %v676 = vand.u32 %v675, 4294901760
  %677 = vmatmul.f32.gmra.mxu0 %v676
  %v678 = vpop.f32.mrf.mxu0
  %v679 = vadd.f32 %v620, %v678
  %v680 = vand.u32 %v432, 4294901760
  %v681 = vsub.f32 %v432, %v680
  %v682 = vand.u32 %v681, 4294901760
  %683 = vmatmul.f32.gmra.mxu0 %v682
  %v684 = vpop.f32.mrf.mxu0
  %v685 = vadd.f32 %v625, %v684
  %v686 = vand.u32 %v435, 4294901760
  %v687 = vsub.f32 %v435, %v686
  %v688 = vand.u32 %v687, 4294901760
  %689 = vmatmul.f32.gmra.mxu0 %v688
  %v690 = vpop.f32.mrf.mxu0
  %v691 = vadd.f32 %v630, %v690
  %v692 = vand.u32 %v438, 4294901760
  %v693 = vsub.f32 %v438, %v692
  %v694 = vand.u32 %v693, 4294901760
  %695 = vmatmul.f32.gmra.mxu0 %v694
  %v696 = vpop.f32.mrf.mxu0
  %v697 = vadd.f32 %v635, %v696
  %698 = vdwg.mxu0
  %699 = vmatpush.msra.mxu0 0.0
  %700 = vmatpush.msra.mxu0 0.0
  %701 = vmatpush.msra.mxu0 0.0
  %702 = vmatpush.msra.mxu0 0.0
  %703 = vmatpush.msra.mxu0 0.0
  %704 = vmatpush.msra.mxu0 0.0
  %705 = vmatpush.msra.mxu0 0.0
  %706 = vmatpush.msra.mxu0 0.0
  %707 = vmatpush.msra.mxu0 0.0
  %708 = vmatpush.msra.mxu0 0.0
  %709 = vmatpush.msra.mxu0 0.0
  %710 = vmatpush.msra.mxu0 0.0
  %711 = vmatpush.msra.mxu0 0.0
  %v712 = vand.u32 %v441, 4294901760
  %v713 = vsub.f32 %v441, %v712
  %v714 = vand.u32 %v713, 4294901760
  %715 = vmatpush.msra.mxu0 %v714
  %v716 = vand.u32 %v415, 4294901760
  %v717 = vsub.f32 %v415, %v716
  %v718 = vand.u32 %v717, 4294901760
  %719 = vmatpush.msra.mxu0 %v718
  %v720 = vand.u32 %v414, 4294901760
  %v721 = vsub.f32 %v414, %v720
  %v722 = vand.u32 %v721, 4294901760
  %723 = vmatpush.msra.mxu0 %v722
  %v724 = vand.u32 %v420, 4294901760
  %725 = vmatmul.f32.gmra.mxu0 %v724
  %v726 = vpop.f32.mrf.mxu0
  %v727 = vadd.f32 %v661, %v726
  %v728 = vand.u32 %v423, 4294901760
  %729 = vmatmul.f32.gmra.mxu0 %v728
  %v730 = vpop.f32.mrf.mxu0
  %v731 = vadd.f32 %v667, %v730
  %v732 = vand.u32 %v426, 4294901760
  %733 = vmatmul.f32.gmra.mxu0 %v732
  %v734 = vpop.f32.mrf.mxu0
  %v735 = vadd.f32 %v673, %v734
  %v736 = vand.u32 %v429, 4294901760
  %737 = vmatmul.f32.gmra.mxu0 %v736
  %v738 = vpop.f32.mrf.mxu0
  %v739 = vadd.f32 %v679, %v738
  %v740 = vand.u32 %v432, 4294901760
  %741 = vmatmul.f32.gmra.mxu0 %v740
  %v742 = vpop.f32.mrf.mxu0
  %v743 = vadd.f32 %v685, %v742
  %v744 = vand.u32 %v435, 4294901760
  %745 = vmatmul.f32.gmra.mxu0 %v744
  %v746 = vpop.f32.mrf.mxu0
  %v747 = vadd.f32 %v691, %v746
  %v748 = vand.u32 %v438, 4294901760
  %749 = vmatmul.f32.gmra.mxu0 %v748
  %v750 = vpop.f32.mrf.mxu0
  %v751 = vadd.f32 %v697, %v750
  %752 = vdwg.mxu0
  %753 = vmatpush.msra.mxu0 0.0
  %754 = vmatpush.msra.mxu0 0.0
  %755 = vmatpush.msra.mxu0 0.0
  %756 = vmatpush.msra.mxu0 0.0
  %757 = vmatpush.msra.mxu0 0.0
  %758 = vmatpush.msra.mxu0 0.0
  %759 = vmatpush.msra.mxu0 0.0
  %760 = vmatpush.msra.mxu0 0.0
  %761 = vmatpush.msra.mxu0 0.0
  %762 = vmatpush.msra.mxu0 0.0
  %763 = vmatpush.msra.mxu0 0.0
  %764 = vmatpush.msra.mxu0 0.0
  %765 = vmatpush.msra.mxu0 0.0
  %v766 = vand.u32 %v441, 4294901760
  %767 = vmatpush.msra.mxu0 %v766
  %v768 = vand.u32 %v415, 4294901760
  %769 = vmatpush.msra.mxu0 %v768
  %v770 = vand.u32 %v414, 4294901760
  %771 = vmatpush.msra.mxu0 %v770
  %v772 = vand.u32 %v420, 4294901760
  %773 = vmatmul.f32.gmra.mxu0 %v772
  %v774 = vpop.f32.mrf.mxu0
  %v775 = vadd.f32 %v727, %v774
  %v776 = vand.u32 %v423, 4294901760
  %777 = vmatmul.f32.gmra.mxu0 %v776
  %v778 = vpop.f32.mrf.mxu0
  %v779 = vadd.f32 %v731, %v778
  %v780 = vand.u32 %v426, 4294901760
  %781 = vmatmul.f32.gmra.mxu0 %v780
  %v782 = vpop.f32.mrf.mxu0
  %v783 = vadd.f32 %v735, %v782
  %v784 = vand.u32 %v429, 4294901760
  %785 = vmatmul.f32.gmra.mxu0 %v784
  %v786 = vpop.f32.mrf.mxu0
  %v787 = vadd.f32 %v739, %v786
  %v788 = vand.u32 %v432, 4294901760
  %789 = vmatmul.f32.gmra.mxu0 %v788
  %v790 = vpop.f32.mrf.mxu0
  %v791 = vadd.f32 %v743, %v790
  %v792 = vand.u32 %v435, 4294901760
  %793 = vmatmul.f32.gmra.mxu0 %v792
  %v794 = vpop.f32.mrf.mxu0
  %v795 = vadd.f32 %v747, %v794
  %v796 = vand.u32 %v438, 4294901760
  %797 = vmatmul.f32.gmra.mxu0 %v796
  %v798 = vpop.f32.mrf.mxu0
  %v799 = vadd.f32 %v751, %v798
  %800 = vdwg.mxu0
  %v801 = vmax.f32 %v775, 0.0
  %v802 = vmax.f32 %v779, 0.0
  %v803 = vmax.f32 %v783, 0.0
  %v804 = vmax.f32 %v787, 0.0
  %v805 = vmax.f32 %v791, 0.0
  %v806 = vmax.f32 %v795, 0.0
  %v807 = vmax.f32 %v799, 0.0
  %v808 = vld [vmem:[%s1 + $0x40] sm:$0xff]
  %v809 = vld [vmem:[%s1 + $0x48] sm:$0xf]
  %v810 = vld [vmem:[%s1 + $0x50] sm:$0x1]
  %v811 = vperm.slane %v810, 0
  %vm812 = vcmask 97280
  %v814 = vsel %vm812, %v801, 0
  %v817 = vsel %vm812, %v802, 0
  %v820 = vsel %vm812, %v803, 0
  %v823 = vsel %vm812, %v804, 0
  %v826 = vsel %vm812, %v805, 0
  %v829 = vsel %vm812, %v806, 0
  %v832 = vsel %vm812, %v807, 0
  %v835 = vsel %vm45, %v809, 0
  %837 = vmatpush.msra.mxu0 0.0
  %838 = vmatpush.msra.mxu0 0.0
  %839 = vmatpush.msra.mxu0 0.0
  %840 = vmatpush.msra.mxu0 0.0
  %841 = vmatpush.msra.mxu0 0.0
  %842 = vmatpush.msra.mxu0 0.0
  %843 = vmatpush.msra.mxu0 0.0
  %844 = vmatpush.msra.mxu0 0.0
  %845 = vmatpush.msra.mxu0 0.0
  %846 = vmatpush.msra.mxu0 0.0
  %847 = vmatpush.msra.mxu0 0.0
  %848 = vmatpush.msra.mxu0 0.0
  %849 = vmatpush.msra.mxu0 0.0
  %850 = vmatpush.msra.mxu0 0.0
  %v851 = vand.u32 %v835, 4294901760
  %852 = vmatpush.msra.mxu0 %v851
  %v853 = vand.u32 %v808, 4294901760
  %854 = vmatpush.msra.mxu0 %v853
  %v855 = vand.u32 %v814, 4294901760
  %v856 = vsub.f32 %v814, %v855
  %v857 = vand.u32 %v856, 4294901760
  %v858 = vsub.f32 %v856, %v857
  %v859 = vand.u32 %v858, 4294901760
  %860 = vmatmul.f32.gmra.mxu0 %v859
  %v861 = vpop.f32.mrf.mxu0
  %v862 = vadd.f32 %v811, %v861
  %v863 = vand.u32 %v817, 4294901760
  %v864 = vsub.f32 %v817, %v863
  %v865 = vand.u32 %v864, 4294901760
  %v866 = vsub.f32 %v864, %v865
  %v867 = vand.u32 %v866, 4294901760
  %868 = vmatmul.f32.gmra.mxu0 %v867
  %v869 = vpop.f32.mrf.mxu0
  %v870 = vadd.f32 %v811, %v869
  %v871 = vand.u32 %v820, 4294901760
  %v872 = vsub.f32 %v820, %v871
  %v873 = vand.u32 %v872, 4294901760
  %v874 = vsub.f32 %v872, %v873
  %v875 = vand.u32 %v874, 4294901760
  %876 = vmatmul.f32.gmra.mxu0 %v875
  %v877 = vpop.f32.mrf.mxu0
  %v878 = vadd.f32 %v811, %v877
  %v879 = vand.u32 %v823, 4294901760
  %v880 = vsub.f32 %v823, %v879
  %v881 = vand.u32 %v880, 4294901760
  %v882 = vsub.f32 %v880, %v881
  %v883 = vand.u32 %v882, 4294901760
  %884 = vmatmul.f32.gmra.mxu0 %v883
  %v885 = vpop.f32.mrf.mxu0
  %v886 = vadd.f32 %v811, %v885
  %v887 = vand.u32 %v826, 4294901760
  %v888 = vsub.f32 %v826, %v887
  %v889 = vand.u32 %v888, 4294901760
  %v890 = vsub.f32 %v888, %v889
  %v891 = vand.u32 %v890, 4294901760
  %892 = vmatmul.f32.gmra.mxu0 %v891
  %v893 = vpop.f32.mrf.mxu0
  %v894 = vadd.f32 %v811, %v893
  %v895 = vand.u32 %v829, 4294901760
  %v896 = vsub.f32 %v829, %v895
  %v897 = vand.u32 %v896, 4294901760
  %v898 = vsub.f32 %v896, %v897
  %v899 = vand.u32 %v898, 4294901760
  %900 = vmatmul.f32.gmra.mxu0 %v899
  %v901 = vpop.f32.mrf.mxu0
  %v902 = vadd.f32 %v811, %v901
  %v903 = vand.u32 %v832, 4294901760
  %v904 = vsub.f32 %v832, %v903
  %v905 = vand.u32 %v904, 4294901760
  %v906 = vsub.f32 %v904, %v905
  %v907 = vand.u32 %v906, 4294901760
  %908 = vmatmul.f32.gmra.mxu0 %v907
  %v909 = vpop.f32.mrf.mxu0
  %v910 = vadd.f32 %v811, %v909
  %911 = vdwg.mxu0
  %912 = vmatpush.msra.mxu0 0.0
  %913 = vmatpush.msra.mxu0 0.0
  %914 = vmatpush.msra.mxu0 0.0
  %915 = vmatpush.msra.mxu0 0.0
  %916 = vmatpush.msra.mxu0 0.0
  %917 = vmatpush.msra.mxu0 0.0
  %918 = vmatpush.msra.mxu0 0.0
  %919 = vmatpush.msra.mxu0 0.0
  %920 = vmatpush.msra.mxu0 0.0
  %921 = vmatpush.msra.mxu0 0.0
  %922 = vmatpush.msra.mxu0 0.0
  %923 = vmatpush.msra.mxu0 0.0
  %924 = vmatpush.msra.mxu0 0.0
  %925 = vmatpush.msra.mxu0 0.0
  %v926 = vand.u32 %v835, 4294901760
  %v927 = vsub.f32 %v835, %v926
  %v928 = vand.u32 %v927, 4294901760
  %v929 = vsub.f32 %v927, %v928
  %v930 = vand.u32 %v929, 4294901760
  %931 = vmatpush.msra.mxu0 %v930
  %v932 = vand.u32 %v808, 4294901760
  %v933 = vsub.f32 %v808, %v932
  %v934 = vand.u32 %v933, 4294901760
  %v935 = vsub.f32 %v933, %v934
  %v936 = vand.u32 %v935, 4294901760
  %937 = vmatpush.msra.mxu0 %v936
  %v938 = vand.u32 %v814, 4294901760
  %939 = vmatmul.f32.gmra.mxu0 %v938
  %v940 = vpop.f32.mrf.mxu0
  %v941 = vadd.f32 %v862, %v940
  %v942 = vand.u32 %v817, 4294901760
  %943 = vmatmul.f32.gmra.mxu0 %v942
  %v944 = vpop.f32.mrf.mxu0
  %v945 = vadd.f32 %v870, %v944
  %v946 = vand.u32 %v820, 4294901760
  %947 = vmatmul.f32.gmra.mxu0 %v946
  %v948 = vpop.f32.mrf.mxu0
  %v949 = vadd.f32 %v878, %v948
  %v950 = vand.u32 %v823, 4294901760
  %951 = vmatmul.f32.gmra.mxu0 %v950
  %v952 = vpop.f32.mrf.mxu0
  %v953 = vadd.f32 %v886, %v952
  %v954 = vand.u32 %v826, 4294901760
  %955 = vmatmul.f32.gmra.mxu0 %v954
  %v956 = vpop.f32.mrf.mxu0
  %v957 = vadd.f32 %v894, %v956
  %v958 = vand.u32 %v829, 4294901760
  %959 = vmatmul.f32.gmra.mxu0 %v958
  %v960 = vpop.f32.mrf.mxu0
  %v961 = vadd.f32 %v902, %v960
  %v962 = vand.u32 %v832, 4294901760
  %963 = vmatmul.f32.gmra.mxu0 %v962
  %v964 = vpop.f32.mrf.mxu0
  %v965 = vadd.f32 %v910, %v964
  %966 = vdwg.mxu0
  %967 = vmatpush.msra.mxu0 0.0
  %968 = vmatpush.msra.mxu0 0.0
  %969 = vmatpush.msra.mxu0 0.0
  %970 = vmatpush.msra.mxu0 0.0
  %971 = vmatpush.msra.mxu0 0.0
  %972 = vmatpush.msra.mxu0 0.0
  %973 = vmatpush.msra.mxu0 0.0
  %974 = vmatpush.msra.mxu0 0.0
  %975 = vmatpush.msra.mxu0 0.0
  %976 = vmatpush.msra.mxu0 0.0
  %977 = vmatpush.msra.mxu0 0.0
  %978 = vmatpush.msra.mxu0 0.0
  %979 = vmatpush.msra.mxu0 0.0
  %980 = vmatpush.msra.mxu0 0.0
  %v981 = vand.u32 %v835, 4294901760
  %v982 = vsub.f32 %v835, %v981
  %983 = vmatpush.msra.mxu0 %v982
  %v984 = vand.u32 %v808, 4294901760
  %v985 = vsub.f32 %v808, %v984
  %986 = vmatpush.msra.mxu0 %v985
  %v987 = vand.u32 %v814, 4294901760
  %v988 = vsub.f32 %v814, %v987
  %989 = vmatmul.f32.gmra.mxu0 %v988
  %v990 = vpop.f32.mrf.mxu0
  %v991 = vadd.f32 %v941, %v990
  %v992 = vand.u32 %v817, 4294901760
  %v993 = vsub.f32 %v817, %v992
  %994 = vmatmul.f32.gmra.mxu0 %v993
  %v995 = vpop.f32.mrf.mxu0
  %v996 = vadd.f32 %v945, %v995
  %v997 = vand.u32 %v820, 4294901760
  %v998 = vsub.f32 %v820, %v997
  %999 = vmatmul.f32.gmra.mxu0 %v998
  %v1000 = vpop.f32.mrf.mxu0
  %v1001 = vadd.f32 %v949, %v1000
  %v1002 = vand.u32 %v823, 4294901760
  %v1003 = vsub.f32 %v823, %v1002
  %1004 = vmatmul.f32.gmra.mxu0 %v1003
  %v1005 = vpop.f32.mrf.mxu0
  %v1006 = vadd.f32 %v953, %v1005
  %v1007 = vand.u32 %v826, 4294901760
  %v1008 = vsub.f32 %v826, %v1007
  %1009 = vmatmul.f32.gmra.mxu0 %v1008
  %v1010 = vpop.f32.mrf.mxu0
  %v1011 = vadd.f32 %v957, %v1010
  %v1012 = vand.u32 %v829, 4294901760
  %v1013 = vsub.f32 %v829, %v1012
  %1014 = vmatmul.f32.gmra.mxu0 %v1013
  %v1015 = vpop.f32.mrf.mxu0
  %v1016 = vadd.f32 %v961, %v1015
  %v1017 = vand.u32 %v832, 4294901760
  %v1018 = vsub.f32 %v832, %v1017
  %1019 = vmatmul.f32.gmra.mxu0 %v1018
  %v1020 = vpop.f32.mrf.mxu0
  %v1021 = vadd.f32 %v965, %v1020
  %1022 = vdwg.mxu0
  %1023 = vmatpush.msra.mxu0 0.0
  %1024 = vmatpush.msra.mxu0 0.0
  %1025 = vmatpush.msra.mxu0 0.0
  %1026 = vmatpush.msra.mxu0 0.0
  %1027 = vmatpush.msra.mxu0 0.0
  %1028 = vmatpush.msra.mxu0 0.0
  %1029 = vmatpush.msra.mxu0 0.0
  %1030 = vmatpush.msra.mxu0 0.0
  %1031 = vmatpush.msra.mxu0 0.0
  %1032 = vmatpush.msra.mxu0 0.0
  %1033 = vmatpush.msra.mxu0 0.0
  %1034 = vmatpush.msra.mxu0 0.0
  %1035 = vmatpush.msra.mxu0 0.0
  %1036 = vmatpush.msra.mxu0 0.0
  %v1037 = vand.u32 %v835, 4294901760
  %1038 = vmatpush.msra.mxu0 %v1037
  %v1039 = vand.u32 %v808, 4294901760
  %1040 = vmatpush.msra.mxu0 %v1039
  %v1041 = vand.u32 %v814, 4294901760
  %v1042 = vsub.f32 %v814, %v1041
  %v1043 = vand.u32 %v1042, 4294901760
  %1044 = vmatmul.f32.gmra.mxu0 %v1043
  %v1045 = vpop.f32.mrf.mxu0
  %v1046 = vadd.f32 %v991, %v1045
  %v1047 = vand.u32 %v817, 4294901760
  %v1048 = vsub.f32 %v817, %v1047
  %v1049 = vand.u32 %v1048, 4294901760
  %1050 = vmatmul.f32.gmra.mxu0 %v1049
  %v1051 = vpop.f32.mrf.mxu0
  %v1052 = vadd.f32 %v996, %v1051
  %v1053 = vand.u32 %v820, 4294901760
  %v1054 = vsub.f32 %v820, %v1053
  %v1055 = vand.u32 %v1054, 4294901760
  %1056 = vmatmul.f32.gmra.mxu0 %v1055
  %v1057 = vpop.f32.mrf.mxu0
  %v1058 = vadd.f32 %v1001, %v1057
  %v1059 = vand.u32 %v823, 4294901760
  %v1060 = vsub.f32 %v823, %v1059
  %v1061 = vand.u32 %v1060, 4294901760
  %1062 = vmatmul.f32.gmra.mxu0 %v1061
  %v1063 = vpop.f32.mrf.mxu0
  %v1064 = vadd.f32 %v1006, %v1063
  %v1065 = vand.u32 %v826, 4294901760
  %v1066 = vsub.f32 %v826, %v1065
  %v1067 = vand.u32 %v1066, 4294901760
  %1068 = vmatmul.f32.gmra.mxu0 %v1067
  %v1069 = vpop.f32.mrf.mxu0
  %v1070 = vadd.f32 %v1011, %v1069
  %v1071 = vand.u32 %v829, 4294901760
  %v1072 = vsub.f32 %v829, %v1071
  %v1073 = vand.u32 %v1072, 4294901760
  %1074 = vmatmul.f32.gmra.mxu0 %v1073
  %v1075 = vpop.f32.mrf.mxu0
  %v1076 = vadd.f32 %v1016, %v1075
  %v1077 = vand.u32 %v832, 4294901760
  %v1078 = vsub.f32 %v832, %v1077
  %v1079 = vand.u32 %v1078, 4294901760
  %1080 = vmatmul.f32.gmra.mxu0 %v1079
  %v1081 = vpop.f32.mrf.mxu0
  %v1082 = vadd.f32 %v1021, %v1081
  %1083 = vdwg.mxu0
  %1084 = vmatpush.msra.mxu0 0.0
  %1085 = vmatpush.msra.mxu0 0.0
  %1086 = vmatpush.msra.mxu0 0.0
  %1087 = vmatpush.msra.mxu0 0.0
  %1088 = vmatpush.msra.mxu0 0.0
  %1089 = vmatpush.msra.mxu0 0.0
  %1090 = vmatpush.msra.mxu0 0.0
  %1091 = vmatpush.msra.mxu0 0.0
  %1092 = vmatpush.msra.mxu0 0.0
  %1093 = vmatpush.msra.mxu0 0.0
  %1094 = vmatpush.msra.mxu0 0.0
  %1095 = vmatpush.msra.mxu0 0.0
  %1096 = vmatpush.msra.mxu0 0.0
  %1097 = vmatpush.msra.mxu0 0.0
  %v1098 = vand.u32 %v835, 4294901760
  %v1099 = vsub.f32 %v835, %v1098
  %v1100 = vand.u32 %v1099, 4294901760
  %1101 = vmatpush.msra.mxu0 %v1100
  %v1102 = vand.u32 %v808, 4294901760
  %v1103 = vsub.f32 %v808, %v1102
  %v1104 = vand.u32 %v1103, 4294901760
  %1105 = vmatpush.msra.mxu0 %v1104
  %v1106 = vand.u32 %v814, 4294901760
  %1107 = vmatmul.f32.gmra.mxu0 %v1106
  %v1108 = vpop.f32.mrf.mxu0
  %v1109 = vadd.f32 %v1046, %v1108
  %v1110 = vand.u32 %v817, 4294901760
  %1111 = vmatmul.f32.gmra.mxu0 %v1110
  %v1112 = vpop.f32.mrf.mxu0
  %v1113 = vadd.f32 %v1052, %v1112
  %v1114 = vand.u32 %v820, 4294901760
  %1115 = vmatmul.f32.gmra.mxu0 %v1114
  %v1116 = vpop.f32.mrf.mxu0
  %v1117 = vadd.f32 %v1058, %v1116
  %v1118 = vand.u32 %v823, 4294901760
  %1119 = vmatmul.f32.gmra.mxu0 %v1118
  %v1120 = vpop.f32.mrf.mxu0
  %v1121 = vadd.f32 %v1064, %v1120
  %v1122 = vand.u32 %v826, 4294901760
  %1123 = vmatmul.f32.gmra.mxu0 %v1122
  %v1124 = vpop.f32.mrf.mxu0
  %v1125 = vadd.f32 %v1070, %v1124
  %v1126 = vand.u32 %v829, 4294901760
  %1127 = vmatmul.f32.gmra.mxu0 %v1126
  %v1128 = vpop.f32.mrf.mxu0
  %v1129 = vadd.f32 %v1076, %v1128
  %v1130 = vand.u32 %v832, 4294901760
  %1131 = vmatmul.f32.gmra.mxu0 %v1130
  %v1132 = vpop.f32.mrf.mxu0
  %v1133 = vadd.f32 %v1082, %v1132
  %1134 = vdwg.mxu0
  %1135 = vmatpush.msra.mxu0 0.0
  %1136 = vmatpush.msra.mxu0 0.0
  %1137 = vmatpush.msra.mxu0 0.0
  %1138 = vmatpush.msra.mxu0 0.0
  %1139 = vmatpush.msra.mxu0 0.0
  %1140 = vmatpush.msra.mxu0 0.0
  %1141 = vmatpush.msra.mxu0 0.0
  %1142 = vmatpush.msra.mxu0 0.0
  %1143 = vmatpush.msra.mxu0 0.0
  %1144 = vmatpush.msra.mxu0 0.0
  %1145 = vmatpush.msra.mxu0 0.0
  %1146 = vmatpush.msra.mxu0 0.0
  %1147 = vmatpush.msra.mxu0 0.0
  %1148 = vmatpush.msra.mxu0 0.0
  %v1149 = vand.u32 %v835, 4294901760
  %1150 = vmatpush.msra.mxu0 %v1149
  %v1151 = vand.u32 %v808, 4294901760
  %1152 = vmatpush.msra.mxu0 %v1151
  %v1153 = vand.u32 %v814, 4294901760
  %1154 = vmatmul.f32.gmra.mxu0 %v1153
  %v1155 = vpop.f32.mrf.mxu0
  %v1156 = vadd.f32 %v1109, %v1155
  %v1157 = vand.u32 %v817, 4294901760
  %1158 = vmatmul.f32.gmra.mxu0 %v1157
  %v1159 = vpop.f32.mrf.mxu0
  %v1160 = vadd.f32 %v1113, %v1159
  %v1161 = vand.u32 %v820, 4294901760
  %1162 = vmatmul.f32.gmra.mxu0 %v1161
  %v1163 = vpop.f32.mrf.mxu0
  %v1164 = vadd.f32 %v1117, %v1163
  %v1165 = vand.u32 %v823, 4294901760
  %1166 = vmatmul.f32.gmra.mxu0 %v1165
  %v1167 = vpop.f32.mrf.mxu0
  %v1168 = vadd.f32 %v1121, %v1167
  %v1169 = vand.u32 %v826, 4294901760
  %1170 = vmatmul.f32.gmra.mxu0 %v1169
  %v1171 = vpop.f32.mrf.mxu0
  %v1172 = vadd.f32 %v1125, %v1171
  %v1173 = vand.u32 %v829, 4294901760
  %1174 = vmatmul.f32.gmra.mxu0 %v1173
  %v1175 = vpop.f32.mrf.mxu0
  %v1176 = vadd.f32 %v1129, %v1175
  %v1177 = vand.u32 %v832, 4294901760
  %1178 = vmatmul.f32.gmra.mxu0 %v1177
  %v1179 = vpop.f32.mrf.mxu0
  %v1180 = vadd.f32 %v1133, %v1179
  %1181 = vdwg.mxu0
  %v1182 = vmax.f32 %v1156, 0.0
  %v1183 = vmax.f32 %v1160, 0.0
  %v1184 = vmax.f32 %v1164, 0.0
  %v1185 = vmax.f32 %v1168, 0.0
  %v1186 = vmax.f32 %v1172, 0.0
  %v1187 = vmax.f32 %v1176, 0.0
  %v1188 = vmax.f32 %v1180, 0.0
  %v1189 = vld [vmem:[%s1 + $0x58] sm:$0xf]
  %v1190 = vld [vmem:[%s1 + $0x60] sm:$0x1]
  %v1191 = vperm.slane %v1190, 0
  %vm1192 = vcmask 31744
  %v1194 = vsel %vm1192, %v1182, 0
  %v1197 = vsel %vm1192, %v1183, 0
  %v1200 = vsel %vm1192, %v1184, 0
  %v1203 = vsel %vm1192, %v1185, 0
  %v1206 = vsel %vm1192, %v1186, 0
  %v1209 = vsel %vm1192, %v1187, 0
  %v1212 = vsel %vm1192, %v1188, 0
  %v1215 = vsel %vm45, %v1189, 0
  %1217 = vmatpush.msra.mxu0 0.0
  %1218 = vmatpush.msra.mxu0 0.0
  %1219 = vmatpush.msra.mxu0 0.0
  %1220 = vmatpush.msra.mxu0 0.0
  %1221 = vmatpush.msra.mxu0 0.0
  %1222 = vmatpush.msra.mxu0 0.0
  %1223 = vmatpush.msra.mxu0 0.0
  %1224 = vmatpush.msra.mxu0 0.0
  %1225 = vmatpush.msra.mxu0 0.0
  %1226 = vmatpush.msra.mxu0 0.0
  %1227 = vmatpush.msra.mxu0 0.0
  %1228 = vmatpush.msra.mxu0 0.0
  %1229 = vmatpush.msra.mxu0 0.0
  %1230 = vmatpush.msra.mxu0 0.0
  %1231 = vmatpush.msra.mxu0 0.0
  %v1232 = vand.u32 %v1215, 4294901760
  %1233 = vmatpush.msra.mxu0 %v1232
  %v1234 = vand.u32 %v1194, 4294901760
  %v1235 = vsub.f32 %v1194, %v1234
  %v1236 = vand.u32 %v1235, 4294901760
  %v1237 = vsub.f32 %v1235, %v1236
  %v1238 = vand.u32 %v1237, 4294901760
  %1239 = vmatmul.f32.gmra.mxu0 %v1238
  %v1240 = vpop.f32.mrf.mxu0
  %v1241 = vadd.f32 %v1191, %v1240
  %v1242 = vand.u32 %v1197, 4294901760
  %v1243 = vsub.f32 %v1197, %v1242
  %v1244 = vand.u32 %v1243, 4294901760
  %v1245 = vsub.f32 %v1243, %v1244
  %v1246 = vand.u32 %v1245, 4294901760
  %1247 = vmatmul.f32.gmra.mxu0 %v1246
  %v1248 = vpop.f32.mrf.mxu0
  %v1249 = vadd.f32 %v1191, %v1248
  %v1250 = vand.u32 %v1200, 4294901760
  %v1251 = vsub.f32 %v1200, %v1250
  %v1252 = vand.u32 %v1251, 4294901760
  %v1253 = vsub.f32 %v1251, %v1252
  %v1254 = vand.u32 %v1253, 4294901760
  %1255 = vmatmul.f32.gmra.mxu0 %v1254
  %v1256 = vpop.f32.mrf.mxu0
  %v1257 = vadd.f32 %v1191, %v1256
  %v1258 = vand.u32 %v1203, 4294901760
  %v1259 = vsub.f32 %v1203, %v1258
  %v1260 = vand.u32 %v1259, 4294901760
  %v1261 = vsub.f32 %v1259, %v1260
  %v1262 = vand.u32 %v1261, 4294901760
  %1263 = vmatmul.f32.gmra.mxu0 %v1262
  %v1264 = vpop.f32.mrf.mxu0
  %v1265 = vadd.f32 %v1191, %v1264
  %v1266 = vand.u32 %v1206, 4294901760
  %v1267 = vsub.f32 %v1206, %v1266
  %v1268 = vand.u32 %v1267, 4294901760
  %v1269 = vsub.f32 %v1267, %v1268
  %v1270 = vand.u32 %v1269, 4294901760
  %1271 = vmatmul.f32.gmra.mxu0 %v1270
  %v1272 = vpop.f32.mrf.mxu0
  %v1273 = vadd.f32 %v1191, %v1272
  %v1274 = vand.u32 %v1209, 4294901760
  %v1275 = vsub.f32 %v1209, %v1274
  %v1276 = vand.u32 %v1275, 4294901760
  %v1277 = vsub.f32 %v1275, %v1276
  %v1278 = vand.u32 %v1277, 4294901760
  %1279 = vmatmul.f32.gmra.mxu0 %v1278
  %v1280 = vpop.f32.mrf.mxu0
  %v1281 = vadd.f32 %v1191, %v1280
  %v1282 = vand.u32 %v1212, 4294901760
  %v1283 = vsub.f32 %v1212, %v1282
  %v1284 = vand.u32 %v1283, 4294901760
  %v1285 = vsub.f32 %v1283, %v1284
  %v1286 = vand.u32 %v1285, 4294901760
  %1287 = vmatmul.f32.gmra.mxu0 %v1286
  %v1288 = vpop.f32.mrf.mxu0
  %v1289 = vadd.f32 %v1191, %v1288
  %1290 = vdwg.mxu0
  %1291 = vmatpush.msra.mxu0 0.0
  %1292 = vmatpush.msra.mxu0 0.0
  %1293 = vmatpush.msra.mxu0 0.0
  %1294 = vmatpush.msra.mxu0 0.0
  %1295 = vmatpush.msra.mxu0 0.0
  %1296 = vmatpush.msra.mxu0 0.0
  %1297 = vmatpush.msra.mxu0 0.0
  %1298 = vmatpush.msra.mxu0 0.0
  %1299 = vmatpush.msra.mxu0 0.0
  %1300 = vmatpush.msra.mxu0 0.0
  %1301 = vmatpush.msra.mxu0 0.0
  %1302 = vmatpush.msra.mxu0 0.0
  %1303 = vmatpush.msra.mxu0 0.0
  %1304 = vmatpush.msra.mxu0 0.0
  %1305 = vmatpush.msra.mxu0 0.0
  %v1306 = vand.u32 %v1215, 4294901760
  %v1307 = vsub.f32 %v1215, %v1306
  %v1308 = vand.u32 %v1307, 4294901760
  %v1309 = vsub.f32 %v1307, %v1308
  %v1310 = vand.u32 %v1309, 4294901760
  %1311 = vmatpush.msra.mxu0 %v1310
  %v1312 = vand.u32 %v1194, 4294901760
  %1313 = vmatmul.f32.gmra.mxu0 %v1312
  %v1314 = vpop.f32.mrf.mxu0
  %v1315 = vadd.f32 %v1241, %v1314
  %v1316 = vand.u32 %v1197, 4294901760
  %1317 = vmatmul.f32.gmra.mxu0 %v1316
  %v1318 = vpop.f32.mrf.mxu0
  %v1319 = vadd.f32 %v1249, %v1318
  %v1320 = vand.u32 %v1200, 4294901760
  %1321 = vmatmul.f32.gmra.mxu0 %v1320
  %v1322 = vpop.f32.mrf.mxu0
  %v1323 = vadd.f32 %v1257, %v1322
  %v1324 = vand.u32 %v1203, 4294901760
  %1325 = vmatmul.f32.gmra.mxu0 %v1324
  %v1326 = vpop.f32.mrf.mxu0
  %v1327 = vadd.f32 %v1265, %v1326
  %v1328 = vand.u32 %v1206, 4294901760
  %1329 = vmatmul.f32.gmra.mxu0 %v1328
  %v1330 = vpop.f32.mrf.mxu0
  %v1331 = vadd.f32 %v1273, %v1330
  %v1332 = vand.u32 %v1209, 4294901760
  %1333 = vmatmul.f32.gmra.mxu0 %v1332
  %v1334 = vpop.f32.mrf.mxu0
  %v1335 = vadd.f32 %v1281, %v1334
  %v1336 = vand.u32 %v1212, 4294901760
  %1337 = vmatmul.f32.gmra.mxu0 %v1336
  %v1338 = vpop.f32.mrf.mxu0
  %v1339 = vadd.f32 %v1289, %v1338
  %1340 = vdwg.mxu0
  %1341 = vmatpush.msra.mxu0 0.0
  %1342 = vmatpush.msra.mxu0 0.0
  %1343 = vmatpush.msra.mxu0 0.0
  %1344 = vmatpush.msra.mxu0 0.0
  %1345 = vmatpush.msra.mxu0 0.0
  %1346 = vmatpush.msra.mxu0 0.0
  %1347 = vmatpush.msra.mxu0 0.0
  %1348 = vmatpush.msra.mxu0 0.0
  %1349 = vmatpush.msra.mxu0 0.0
  %1350 = vmatpush.msra.mxu0 0.0
  %1351 = vmatpush.msra.mxu0 0.0
  %1352 = vmatpush.msra.mxu0 0.0
  %1353 = vmatpush.msra.mxu0 0.0
  %1354 = vmatpush.msra.mxu0 0.0
  %1355 = vmatpush.msra.mxu0 0.0
  %v1356 = vand.u32 %v1215, 4294901760
  %v1357 = vsub.f32 %v1215, %v1356
  %1358 = vmatpush.msra.mxu0 %v1357
  %v1359 = vand.u32 %v1194, 4294901760
  %v1360 = vsub.f32 %v1194, %v1359
  %1361 = vmatmul.f32.gmra.mxu0 %v1360
  %v1362 = vpop.f32.mrf.mxu0
  %v1363 = vadd.f32 %v1315, %v1362
  %v1364 = vand.u32 %v1197, 4294901760
  %v1365 = vsub.f32 %v1197, %v1364
  %1366 = vmatmul.f32.gmra.mxu0 %v1365
  %v1367 = vpop.f32.mrf.mxu0
  %v1368 = vadd.f32 %v1319, %v1367
  %v1369 = vand.u32 %v1200, 4294901760
  %v1370 = vsub.f32 %v1200, %v1369
  %1371 = vmatmul.f32.gmra.mxu0 %v1370
  %v1372 = vpop.f32.mrf.mxu0
  %v1373 = vadd.f32 %v1323, %v1372
  %v1374 = vand.u32 %v1203, 4294901760
  %v1375 = vsub.f32 %v1203, %v1374
  %1376 = vmatmul.f32.gmra.mxu0 %v1375
  %v1377 = vpop.f32.mrf.mxu0
  %v1378 = vadd.f32 %v1327, %v1377
  %v1379 = vand.u32 %v1206, 4294901760
  %v1380 = vsub.f32 %v1206, %v1379
  %1381 = vmatmul.f32.gmra.mxu0 %v1380
  %v1382 = vpop.f32.mrf.mxu0
  %v1383 = vadd.f32 %v1331, %v1382
  %v1384 = vand.u32 %v1209, 4294901760
  %v1385 = vsub.f32 %v1209, %v1384
  %1386 = vmatmul.f32.gmra.mxu0 %v1385
  %v1387 = vpop.f32.mrf.mxu0
  %v1388 = vadd.f32 %v1335, %v1387
  %v1389 = vand.u32 %v1212, 4294901760
  %v1390 = vsub.f32 %v1212, %v1389
  %1391 = vmatmul.f32.gmra.mxu0 %v1390
  %v1392 = vpop.f32.mrf.mxu0
  %v1393 = vadd.f32 %v1339, %v1392
  %1394 = vdwg.mxu0
  %1395 = vmatpush.msra.mxu0 0.0
  %1396 = vmatpush.msra.mxu0 0.0
  %1397 = vmatpush.msra.mxu0 0.0
  %1398 = vmatpush.msra.mxu0 0.0
  %1399 = vmatpush.msra.mxu0 0.0
  %1400 = vmatpush.msra.mxu0 0.0
  %1401 = vmatpush.msra.mxu0 0.0
  %1402 = vmatpush.msra.mxu0 0.0
  %1403 = vmatpush.msra.mxu0 0.0
  %1404 = vmatpush.msra.mxu0 0.0
  %1405 = vmatpush.msra.mxu0 0.0
  %1406 = vmatpush.msra.mxu0 0.0
  %1407 = vmatpush.msra.mxu0 0.0
  %1408 = vmatpush.msra.mxu0 0.0
  %1409 = vmatpush.msra.mxu0 0.0
  %v1410 = vand.u32 %v1215, 4294901760
  %1411 = vmatpush.msra.mxu0 %v1410
  %v1412 = vand.u32 %v1194, 4294901760
  %v1413 = vsub.f32 %v1194, %v1412
  %v1414 = vand.u32 %v1413, 4294901760
  %1415 = vmatmul.f32.gmra.mxu0 %v1414
  %v1416 = vpop.f32.mrf.mxu0
  %v1417 = vadd.f32 %v1363, %v1416
  %v1418 = vand.u32 %v1197, 4294901760
  %v1419 = vsub.f32 %v1197, %v1418
  %v1420 = vand.u32 %v1419, 4294901760
  %1421 = vmatmul.f32.gmra.mxu0 %v1420
  %v1422 = vpop.f32.mrf.mxu0
  %v1423 = vadd.f32 %v1368, %v1422
  %v1424 = vand.u32 %v1200, 4294901760
  %v1425 = vsub.f32 %v1200, %v1424
  %v1426 = vand.u32 %v1425, 4294901760
  %1427 = vmatmul.f32.gmra.mxu0 %v1426
  %v1428 = vpop.f32.mrf.mxu0
  %v1429 = vadd.f32 %v1373, %v1428
  %v1430 = vand.u32 %v1203, 4294901760
  %v1431 = vsub.f32 %v1203, %v1430
  %v1432 = vand.u32 %v1431, 4294901760
  %1433 = vmatmul.f32.gmra.mxu0 %v1432
  %v1434 = vpop.f32.mrf.mxu0
  %v1435 = vadd.f32 %v1378, %v1434
  %v1436 = vand.u32 %v1206, 4294901760
  %v1437 = vsub.f32 %v1206, %v1436
  %v1438 = vand.u32 %v1437, 4294901760
  %1439 = vmatmul.f32.gmra.mxu0 %v1438
  %v1440 = vpop.f32.mrf.mxu0
  %v1441 = vadd.f32 %v1383, %v1440
  %v1442 = vand.u32 %v1209, 4294901760
  %v1443 = vsub.f32 %v1209, %v1442
  %v1444 = vand.u32 %v1443, 4294901760
  %1445 = vmatmul.f32.gmra.mxu0 %v1444
  %v1446 = vpop.f32.mrf.mxu0
  %v1447 = vadd.f32 %v1388, %v1446
  %v1448 = vand.u32 %v1212, 4294901760
  %v1449 = vsub.f32 %v1212, %v1448
  %v1450 = vand.u32 %v1449, 4294901760
  %1451 = vmatmul.f32.gmra.mxu0 %v1450
  %v1452 = vpop.f32.mrf.mxu0
  %v1453 = vadd.f32 %v1393, %v1452
  %1454 = vdwg.mxu0
  %1455 = vmatpush.msra.mxu0 0.0
  %1456 = vmatpush.msra.mxu0 0.0
  %1457 = vmatpush.msra.mxu0 0.0
  %1458 = vmatpush.msra.mxu0 0.0
  %1459 = vmatpush.msra.mxu0 0.0
  %1460 = vmatpush.msra.mxu0 0.0
  %1461 = vmatpush.msra.mxu0 0.0
  %1462 = vmatpush.msra.mxu0 0.0
  %1463 = vmatpush.msra.mxu0 0.0
  %1464 = vmatpush.msra.mxu0 0.0
  %1465 = vmatpush.msra.mxu0 0.0
  %1466 = vmatpush.msra.mxu0 0.0
  %1467 = vmatpush.msra.mxu0 0.0
  %1468 = vmatpush.msra.mxu0 0.0
  %1469 = vmatpush.msra.mxu0 0.0
  %v1470 = vand.u32 %v1215, 4294901760
  %v1471 = vsub.f32 %v1215, %v1470
  %v1472 = vand.u32 %v1471, 4294901760
  %1473 = vmatpush.msra.mxu0 %v1472
  %v1474 = vand.u32 %v1194, 4294901760
  %1475 = vmatmul.f32.gmra.mxu0 %v1474
  %v1476 = vpop.f32.mrf.mxu0
  %v1477 = vadd.f32 %v1417, %v1476
  %v1478 = vand.u32 %v1197, 4294901760
  %1479 = vmatmul.f32.gmra.mxu0 %v1478
  %v1480 = vpop.f32.mrf.mxu0
  %v1481 = vadd.f32 %v1423, %v1480
  %v1482 = vand.u32 %v1200, 4294901760
  %1483 = vmatmul.f32.gmra.mxu0 %v1482
  %v1484 = vpop.f32.mrf.mxu0
  %v1485 = vadd.f32 %v1429, %v1484
  %v1486 = vand.u32 %v1203, 4294901760
  %1487 = vmatmul.f32.gmra.mxu0 %v1486
  %v1488 = vpop.f32.mrf.mxu0
  %v1489 = vadd.f32 %v1435, %v1488
  %v1490 = vand.u32 %v1206, 4294901760
  %1491 = vmatmul.f32.gmra.mxu0 %v1490
  %v1492 = vpop.f32.mrf.mxu0
  %v1493 = vadd.f32 %v1441, %v1492
  %v1494 = vand.u32 %v1209, 4294901760
  %1495 = vmatmul.f32.gmra.mxu0 %v1494
  %v1496 = vpop.f32.mrf.mxu0
  %v1497 = vadd.f32 %v1447, %v1496
  %v1498 = vand.u32 %v1212, 4294901760
  %1499 = vmatmul.f32.gmra.mxu0 %v1498
  %v1500 = vpop.f32.mrf.mxu0
  %v1501 = vadd.f32 %v1453, %v1500
  %1502 = vdwg.mxu0
  %1503 = vmatpush.msra.mxu0 0.0
  %1504 = vmatpush.msra.mxu0 0.0
  %1505 = vmatpush.msra.mxu0 0.0
  %1506 = vmatpush.msra.mxu0 0.0
  %1507 = vmatpush.msra.mxu0 0.0
  %1508 = vmatpush.msra.mxu0 0.0
  %1509 = vmatpush.msra.mxu0 0.0
  %1510 = vmatpush.msra.mxu0 0.0
  %1511 = vmatpush.msra.mxu0 0.0
  %1512 = vmatpush.msra.mxu0 0.0
  %1513 = vmatpush.msra.mxu0 0.0
  %1514 = vmatpush.msra.mxu0 0.0
  %1515 = vmatpush.msra.mxu0 0.0
  %1516 = vmatpush.msra.mxu0 0.0
  %1517 = vmatpush.msra.mxu0 0.0
  %v1518 = vand.u32 %v1215, 4294901760
  %1519 = vmatpush.msra.mxu0 %v1518
  %v1520 = vand.u32 %v1194, 4294901760
  %1521 = vmatmul.f32.gmra.mxu0 %v1520
  %v1522 = vpop.f32.mrf.mxu0
  %v1523 = vadd.f32 %v1477, %v1522
  %v1524 = vand.u32 %v1197, 4294901760
  %1525 = vmatmul.f32.gmra.mxu0 %v1524
  %v1526 = vpop.f32.mrf.mxu0
  %v1527 = vadd.f32 %v1481, %v1526
  %v1528 = vand.u32 %v1200, 4294901760
  %1529 = vmatmul.f32.gmra.mxu0 %v1528
  %v1530 = vpop.f32.mrf.mxu0
  %v1531 = vadd.f32 %v1485, %v1530
  %v1532 = vand.u32 %v1203, 4294901760
  %1533 = vmatmul.f32.gmra.mxu0 %v1532
  %v1534 = vpop.f32.mrf.mxu0
  %v1535 = vadd.f32 %v1489, %v1534
  %v1536 = vand.u32 %v1206, 4294901760
  %1537 = vmatmul.f32.gmra.mxu0 %v1536
  %v1538 = vpop.f32.mrf.mxu0
  %v1539 = vadd.f32 %v1493, %v1538
  %v1540 = vand.u32 %v1209, 4294901760
  %1541 = vmatmul.f32.gmra.mxu0 %v1540
  %v1542 = vpop.f32.mrf.mxu0
  %v1543 = vadd.f32 %v1497, %v1542
  %v1544 = vand.u32 %v1212, 4294901760
  %1545 = vmatmul.f32.gmra.mxu0 %v1544
  %v1546 = vpop.f32.mrf.mxu0
  %v1547 = vadd.f32 %v1501, %v1546
  %1548 = vdwg.mxu0
  %v1549 = vsel %vm812, %v1523, -inf
  %1550 = vmax.xlane.f32.xlu0 %v1549
  %v1551 = vpop.xlane.xlu0 %1550
  %v1552 = vsel %vm812, %v1527, -inf
  %1553 = vmax.xlane.f32.xlu0 %v1552
  %v1554 = vpop.xlane.xlu0 %1553
  %v1555 = vsel %vm812, %v1531, -inf
  %1556 = vmax.xlane.f32.xlu0 %v1555
  %v1557 = vpop.xlane.xlu0 %1556
  %v1558 = vsel %vm812, %v1535, -inf
  %1559 = vmax.xlane.f32.xlu0 %v1558
  %v1560 = vpop.xlane.xlu0 %1559
  %v1561 = vsel %vm812, %v1539, -inf
  %1562 = vmax.xlane.f32.xlu0 %v1561
  %v1563 = vpop.xlane.xlu0 %1562
  %v1564 = vsel %vm812, %v1543, -inf
  %1565 = vmax.xlane.f32.xlu0 %v1564
  %v1566 = vpop.xlane.xlu0 %1565
  %vm1567 = vcmask 91136
  %v1568 = vsel %vm1567, %v1547, -inf
  %1569 = vmax.xlane.f32.xlu0 %v1568
  %v1570 = vpop.xlane.xlu0 %1569
  %v1571 = vsub.f32 %v1523, %v1551
  %v1572 = vsub.f32 %v1527, %v1554
  %v1573 = vsub.f32 %v1531, %v1557
  %v1574 = vsub.f32 %v1535, %v1560
  %v1575 = vsub.f32 %v1539, %v1563
  %v1576 = vsub.f32 %v1543, %v1566
  %v1577 = vsub.f32 %v1547, %v1570
  %v1578 = vmul.f32 %v1571, 1.442695
  %v1579 = vpow.pop %v1578
  %v1580 = vmul.f32 %v1572, 1.442695
  %v1581 = vpow.pop %v1580
  %v1582 = vmul.f32 %v1573, 1.442695
  %v1583 = vpow.pop %v1582
  %v1584 = vmul.f32 %v1574, 1.442695
  %v1585 = vpow.pop %v1584
  %v1586 = vmul.f32 %v1575, 1.442695
  %v1587 = vpow.pop %v1586
  %v1588 = vmul.f32 %v1576, 1.442695
  %v1589 = vpow.pop %v1588
  %v1590 = vmul.f32 %v1577, 1.442695
  %v1591 = vpow.pop %v1590
  %v1592 = vsel %vm812, %v1579, 0.0
  %1593 = vadd.xlane.f32.xlu0 %v1592
  %v1594 = vpop.xlane.xlu0 %1593
  %v1595 = vsel %vm812, %v1581, 0.0
  %1596 = vadd.xlane.f32.xlu0 %v1595
  %v1597 = vpop.xlane.xlu0 %1596
  %v1598 = vsel %vm812, %v1583, 0.0
  %1599 = vadd.xlane.f32.xlu0 %v1598
  %v1600 = vpop.xlane.xlu0 %1599
  %v1601 = vsel %vm812, %v1585, 0.0
  %1602 = vadd.xlane.f32.xlu0 %v1601
  %v1603 = vpop.xlane.xlu0 %1602
  %v1604 = vsel %vm812, %v1587, 0.0
  %1605 = vadd.xlane.f32.xlu0 %v1604
  %v1606 = vpop.xlane.xlu0 %1605
  %v1607 = vsel %vm812, %v1589, 0.0
  %1608 = vadd.xlane.f32.xlu0 %v1607
  %v1609 = vpop.xlane.xlu0 %1608
  %v1610 = vsel %vm1567, %v1591, 0.0
  %1611 = vadd.xlane.f32.xlu0 %v1610
  %v1612 = vpop.xlane.xlu0 %1611
  %v1613 = vrcp.pop %v1594
  %v1614 = vmul.f32 %v1594, %v1613
  %v1615 = vsub.f32 1.0, %v1614
  %v1616 = vmul.f32 %v1613, %v1615
  %v1617 = vadd.f32 %v1613, %v1616
  %vm1618 = vweird.f32 %v1594
  %vm1619 = vweird.f32 %v1613
  %vm1620 = vmor %vm1618, %vm1619
  %v1621 = vsel %vm1620, %v1613, %v1617
  %v1622 = vand.u32 2147483647, %v1594
  %vm1623 = vcmp.eq.f32.partialorder %v1622, 8.507059e+37
  %v1624 = vand.u32 %v1594, 2147483648
  %v1625 = vor.u32 1.1754944e-38, %v1624
  %v1626 = vsel %vm1623, %v1625, %v1621
  %v1627 = vrcp.pop %v1597
  %v1628 = vmul.f32 %v1597, %v1627
  %v1629 = vsub.f32 1.0, %v1628
  %v1630 = vmul.f32 %v1627, %v1629
  %v1631 = vadd.f32 %v1627, %v1630
  %vm1632 = vweird.f32 %v1597
  %vm1633 = vweird.f32 %v1627
  %vm1634 = vmor %vm1632, %vm1633
  %v1635 = vsel %vm1634, %v1627, %v1631
  %v1636 = vand.u32 2147483647, %v1597
  %vm1637 = vcmp.eq.f32.partialorder %v1636, 8.507059e+37
  %v1638 = vand.u32 %v1597, 2147483648
  %v1639 = vor.u32 1.1754944e-38, %v1638
  %v1640 = vsel %vm1637, %v1639, %v1635
  %v1641 = vrcp.pop %v1600
  %v1642 = vmul.f32 %v1600, %v1641
  %v1643 = vsub.f32 1.0, %v1642
  %v1644 = vmul.f32 %v1641, %v1643
  %v1645 = vadd.f32 %v1641, %v1644
  %vm1646 = vweird.f32 %v1600
  %vm1647 = vweird.f32 %v1641
  %vm1648 = vmor %vm1646, %vm1647
  %v1649 = vsel %vm1648, %v1641, %v1645
  %v1650 = vand.u32 2147483647, %v1600
  %vm1651 = vcmp.eq.f32.partialorder %v1650, 8.507059e+37
  %v1652 = vand.u32 %v1600, 2147483648
  %v1653 = vor.u32 1.1754944e-38, %v1652
  %v1654 = vsel %vm1651, %v1653, %v1649
  %v1655 = vrcp.pop %v1603
  %v1656 = vmul.f32 %v1603, %v1655
  %v1657 = vsub.f32 1.0, %v1656
  %v1658 = vmul.f32 %v1655, %v1657
  %v1659 = vadd.f32 %v1655, %v1658
  %vm1660 = vweird.f32 %v1603
  %vm1661 = vweird.f32 %v1655
  %vm1662 = vmor %vm1660, %vm1661
  %v1663 = vsel %vm1662, %v1655, %v1659
  %v1664 = vand.u32 2147483647, %v1603
  %vm1665 = vcmp.eq.f32.partialorder %v1664, 8.507059e+37
  %v1666 = vand.u32 %v1603, 2147483648
  %v1667 = vor.u32 1.1754944e-38, %v1666
  %v1668 = vsel %vm1665, %v1667, %v1663
  %v1669 = vrcp.pop %v1606
  %v1670 = vmul.f32 %v1606, %v1669
  %v1671 = vsub.f32 1.0, %v1670
  %v1672 = vmul.f32 %v1669, %v1671
  %v1673 = vadd.f32 %v1669, %v1672
  %vm1674 = vweird.f32 %v1606
  %vm1675 = vweird.f32 %v1669
  %vm1676 = vmor %vm1674, %vm1675
  %v1677 = vsel %vm1676, %v1669, %v1673
  %v1678 = vand.u32 2147483647, %v1606
  %vm1679 = vcmp.eq.f32.partialorder %v1678, 8.507059e+37
  %v1680 = vand.u32 %v1606, 2147483648
  %v1681 = vor.u32 1.1754944e-38, %v1680
  %v1682 = vsel %vm1679, %v1681, %v1677
  %v1683 = vrcp.pop %v1609
  %v1684 = vmul.f32 %v1609, %v1683
  %v1685 = vsub.f32 1.0, %v1684
  %v1686 = vmul.f32 %v1683, %v1685
  %v1687 = vadd.f32 %v1683, %v1686
  %vm1688 = vweird.f32 %v1609
  %vm1689 = vweird.f32 %v1683
  %vm1690 = vmor %vm1688, %vm1689
  %v1691 = vsel %vm1690, %v1683, %v1687
  %v1692 = vand.u32 2147483647, %v1609
  %vm1693 = vcmp.eq.f32.partialorder %v1692, 8.507059e+37
  %v1694 = vand.u32 %v1609, 2147483648
  %v1695 = vor.u32 1.1754944e-38, %v1694
  %v1696 = vsel %vm1693, %v1695, %v1691
  %v1697 = vrcp.pop %v1612
  %v1698 = vmul.f32 %v1612, %v1697
  %v1699 = vsub.f32 1.0, %v1698
  %v1700 = vmul.f32 %v1697, %v1699
  %v1701 = vadd.f32 %v1697, %v1700
  %vm1702 = vweird.f32 %v1612
  %vm1703 = vweird.f32 %v1697
  %vm1704 = vmor %vm1702, %vm1703
  %v1705 = vsel %vm1704, %v1697, %v1701
  %v1706 = vand.u32 2147483647, %v1612
  %vm1707 = vcmp.eq.f32.partialorder %v1706, 8.507059e+37
  %v1708 = vand.u32 %v1612, 2147483648
  %v1709 = vor.u32 1.1754944e-38, %v1708
  %v1710 = vsel %vm1707, %v1709, %v1705
  %v1711 = vmul.f32 %v1579, %v1626
  %v1712 = vmul.f32 %v1581, %v1640
  %v1713 = vmul.f32 %v1583, %v1654
  %v1714 = vmul.f32 %v1585, %v1668
  %v1715 = vmul.f32 %v1587, %v1682
  %v1716 = vmul.f32 %v1589, %v1696
  %v1717 = vmul.f32 %v1591, %v1710
  %1718 = vst.msk [vmem:[%s2] sm:$0xff] %vm812, %v1711
  %1719 = vst.msk [vmem:[%s2 + $0x8] sm:$0xff] %vm812, %v1712
  %1720 = vst.msk [vmem:[%s2 + $0x10] sm:$0xff] %vm812, %v1713
  %1721 = vst.msk [vmem:[%s2 + $0x18] sm:$0xff] %vm812, %v1714
  %1722 = vst.msk [vmem:[%s2 + $0x20] sm:$0xff] %vm812, %v1715
  %1723 = vst.msk [vmem:[%s2 + $0x28] sm:$0xff] %vm812, %v1716
  %1724 = vst.msk [vmem:[%s2 + $0x30] sm:$0x3] %vm1567, %v1717
  // Predicated region
  $region10: #{tpu_custom_call.1} parent=0 // pred_check
    _
  $region11: #{tpu_custom_call.1} parent=0 // pred_check_branch
    %1726 = sbr.rel (0) target = $region13
  $region12: #{tpu_custom_call.1} parent=0 // pred_region
    _
  $region13: #{tpu_custom_call.1} parent=0 // pred_fallthru
    _
  // Predicated region
  $region14: #{tpu_custom_call.1} parent=0 // pred_check
    _
  $region15: #{tpu_custom_call.1} parent=0 // pred_check_branch
    %1728 = sbr.rel (0) target = $region17
  $region16: #{tpu_custom_call.1} parent=0 // pred_region
    _
  $region17: #{tpu_custom_call.1} parent=0 // pred_fallthru
    _

</llo_original>
